<compile_context>
chip_gen: v7x
topology: tpu7x:2x2x1
jax: 0.10.0
libtpu: 0.0.40
codegen_flags: <defaults>
</compile_context>

<pallas_src>
import jax
import jax.numpy as jnp
from jax import lax
from jax.experimental import pallas as pl
from jax.experimental.pallas import tpu as pltpu


def _make_lstm_kernel(hidden_size, t_chunk, t_total, needs_mask):
    H = hidden_size
    Tc = t_chunk
    unroll = min(Tc, 8)

    def lstm_kernel(x_ref, wx_ref, wh_ref, b_ref,
                    out_ref, hN_ref, cN_ref,
                    gx_scr, h_scr, c_scr):
        chunk = pl.program_id(1)

        @pl.when(chunk == 0)
        def _init():
            h_scr[...] = jnp.zeros_like(h_scr)
            c_scr[...] = jnp.zeros_like(c_scr)

        wx = wx_ref[...]        # (D, 4H)  resident weights
        wh = wh_ref[...]        # (H, 4H)
        bias = b_ref[...]       # (1, 4H)

        # ---- Input projection for the whole chunk (off the recurrent path):
        # one small MXU matmul per timestep into VMEM scratch, bias folded in.
        def proj_body(tau, carry):
            gx_scr[tau] = (
                jnp.dot(x_ref[tau], wx, preferred_element_type=jnp.float32)
                + bias)
            return carry

        lax.fori_loop(0, Tc, proj_body, 0, unroll=unroll)

        # ---- Serial recurrence: only h @ W_h sits on the critical path.
        def step(tau, carry):
            h, c = carry
            gates = gx_scr[tau] + jnp.dot(
                h, wh, preferred_element_type=jnp.float32)      # (Bt, 4H)

            # One EUP sigmoid over the contiguous [i, f, o] slab.
            sig = jax.nn.sigmoid(gates[:, :3 * H])
            i_g = sig[:, 0 * H:1 * H]
            f_g = sig[:, 1 * H:2 * H]
            o_g = sig[:, 2 * H:3 * H]
            c_tilde = jnp.tanh(gates[:, 3 * H:4 * H])

            c_new = f_g * c + i_g * c_tilde
            h_new = o_g * jnp.tanh(c_new)

            if needs_mask:  # static: only present when T was padded
                valid = (chunk * Tc + tau) < t_total
                c_new = jnp.where(valid, c_new, c)
                h_new = jnp.where(valid, h_new, h)

            out_ref[tau] = h_new
            return (h_new, c_new)

        h, c = lax.fori_loop(0, Tc, step, (h_scr[...], c_scr[...]),
                             unroll=unroll)

        # Persist state for the next chunk.
        h_scr[...] = h
        c_scr[...] = c

        # Final hidden / cell state: write only once, at the last time chunk.
        @pl.when(chunk == pl.num_programs(1) - 1)
        def _final():
            hN_ref[...] = h
            cN_ref[...] = c

    return lstm_kernel


def _pick_batch_tile(B):
    """Split batch across two TensorCores (v7x) when sublane tiles stay intact."""
    if B >= 16 and B % 16 == 0:
        return B // 2
    return B


def _pick_time_chunk(T, Bt, D, H, budget_bytes=12 << 20):
    """Largest time chunk fitting the VMEM budget.

    Returns (Tc, needs_pad). Prefers an exact divisor of T (no tail padding)
    when one is reasonably close to the budget-max chunk; otherwise pads the
    tail chunk and masks inside the kernel (never collapses to Tc=1)."""
    G = 4 * H
    # Resident weights (double-buffered by default) + h/c state scratch.
    fixed = 2 * (D * G + H * G + G) * 4 + 2 * Bt * H * 4
    # Per-timestep: X stream + out stream (double-buffered) + gx scratch.
    per_t = (2 * Bt * D + 2 * Bt * H + Bt * G) * 4
    tc_max = max(1, (budget_bytes - fixed) // per_t)
    tc = int(min(T, tc_max))
    for cand in range(tc, 0, -1):
        if T % cand == 0:
            if 2 * cand >= tc:      # close enough to budget-max: avoid padding
                return cand, False
            break
    return tc, True


def simple_lstm_forward(X, W_x, W_h, b):
    """X: (T, B, D); W_x: (D, 4H); W_h: (H, 4H); b: (1, 4H).

    Returns (outputs (T,B,H), (H_final (B,H), C_final (B,H)))."""
    T, B, D = X.shape
    H = W_h.shape[0]
    G = 4 * H
    assert W_x.shape == (D, G)
    assert b.shape == (1, G)

    X = X.astype(jnp.float32)
    W_x = W_x.astype(jnp.float32)
    W_h = W_h.astype(jnp.float32)
    b = b.astype(jnp.float32)

    Bt = _pick_batch_tile(B)
    nb = B // Bt
    Tc, needs_pad = _pick_time_chunk(T, Bt, D, H)
    n_chunks = pl.cdiv(T, Tc)
    T_pad = n_chunks * Tc
    if T_pad != T:
        X = jnp.concatenate(
            [X, jnp.zeros((T_pad - T, B, D), jnp.float32)], axis=0)

    kernel = _make_lstm_kernel(H, Tc, t_total=T, needs_mask=needs_pad)

    out_shapes = (
        jax.ShapeDtypeStruct((T_pad, B, H), jnp.float32),   # outputs
        jax.ShapeDtypeStruct((B, H), jnp.float32),          # final H
        jax.ShapeDtypeStruct((B, H), jnp.float32),          # final C
    )

    grid_spec = pltpu.PrefetchScalarGridSpec(
        num_scalar_prefetch=0,
        grid=(nb, n_chunks),
        in_specs=[
            pl.BlockSpec((Tc, Bt, D), lambda bi, c: (c, bi, 0)),   # X chunk
            pl.BlockSpec((D, G), lambda bi, c: (0, 0)),            # W_x (resident)
            pl.BlockSpec((H, G), lambda bi, c: (0, 0)),            # W_h (resident)
            pl.BlockSpec((1, G), lambda bi, c: (0, 0)),            # bias (resident)
        ],
        out_specs=[
            pl.BlockSpec((Tc, Bt, H), lambda bi, c: (c, bi, 0)),   # outputs chunk
            pl.BlockSpec((Bt, H), lambda bi, c: (bi, 0)),          # final H
            pl.BlockSpec((Bt, H), lambda bi, c: (bi, 0)),          # final C
        ],
        scratch_shapes=[
            pltpu.VMEM((Tc, Bt, G), jnp.float32),   # per-chunk gate pre-activations
            pltpu.VMEM((Bt, H), jnp.float32),       # H state (carried across chunks)
            pltpu.VMEM((Bt, H), jnp.float32),       # C state
        ],
    )

    outputs, H_final, C_final = pl.pallas_call(
        kernel,
        out_shape=out_shapes,
        grid_spec=grid_spec,
        compiler_params=pltpu.CompilerParams(
            # Batch tiles are independent (megacore on v7x); time chunks carry
            # state -> strictly sequential.
            dimension_semantics=("parallel", "arbitrary"),
            vmem_limit_bytes=32 << 20,
        ),
    )(X, W_x, W_h, b)

    if T_pad != T:
        outputs = outputs[:T]
    return outputs, (H_final, C_final)


def _reference_lstm(X, W_x, W_h, b):
    """Pure-JAX reference matching the PyTorch forward (dropout = identity)."""
    T, B, D = X.shape
    H = W_h.shape[0]
    Hs = jnp.zeros((B, H), jnp.float32)
    Cs = jnp.zeros((B, H), jnp.float32)
    hp = jax.lax.Precision.HIGHEST

    def step(carry, x_t):
        h, c = carry
        gates = (jnp.dot(x_t, W_x, precision=hp)
                 + jnp.dot(h, W_h, precision=hp) + b[0])
        i = jax.nn.sigmoid(gates[:, 0 * H:1 * H])
        f = jax.nn.sigmoid(gates[:, 1 * H:2 * H])
        o = jax.nn.sigmoid(gates[:, 2 * H:3 * H])
        ct = jnp.tanh(gates[:, 3 * H:4 * H])
        c = f * c + i * ct
        h = o * jnp.tanh(c)
        return (h, c), h

    (Hf, Cf), outs = jax.lax.scan(step, (Hs, Cs), X)
    return outs, Hf, Cf


if __name__ == "__main__":
    # Small shapes consistent with the module: seq=8, batch=8, input=16, hidden=32
    seq_len, batch, input_size, hidden_size = 8, 8, 16, 32
    sigma = 0.01

    key = jax.random.PRNGKey(0)
    kx, kwxi, kwhi, kwxf, kwhf, kwxo, kwho, kwxc, kwhc = jax.random.split(key, 9)

    # Deterministic parameter init mirroring the PyTorch __init__
    # (randn * sigma weights, zero biases).
    W_xi = jax.random.normal(kwxi, (input_size, hidden_size), jnp.float32) * sigma
    W_hi = jax.random.normal(kwhi, (hidden_size, hidden_size), jnp.float32) * sigma
    W_xf = jax.random.normal(kwxf, (input_size, hidden_size), jnp.float32) * sigma
    W_hf = jax.random.normal(kwhf, (hidden_size, hidden_size), jnp.float32) * sigma
    W_xo = jax.random.normal(kwxo, (input_size, hidden_size), jnp.float32) * sigma
    W_ho = jax.random.normal(kwho, (hidden_size, hidden_size), jnp.float32) * sigma
    W_xc = jax.random.normal(kwxc, (input_size, hidden_size), jnp.float32) * sigma
    W_hc = jax.random.normal(kwhc, (hidden_size, hidden_size), jnp.float32) * sigma
    b_i = jnp.zeros((hidden_size,), jnp.float32)
    b_f = jnp.zeros((hidden_size,), jnp.float32)
    b_o = jnp.zeros((hidden_size,), jnp.float32)
    b_c = jnp.zeros((hidden_size,), jnp.float32)

    # Fuse the four gates along the output dimension: order [i, f, o, c]
    W_x = jnp.concatenate([W_xi, W_xf, W_xo, W_xc], axis=1)      # (D, 4H)
    W_h = jnp.concatenate([W_hi, W_hf, W_ho, W_hc], axis=1)      # (H, 4H)
    b = jnp.concatenate([b_i, b_f, b_o, b_c], axis=0)[None, :]   # (1, 4H)

    X = jax.random.normal(kx, (seq_len, batch, input_size), jnp.float32)

    outputs, (H_final, C_final) = simple_lstm_forward(X, W_x, W_h, b)
    jax.block_until_ready((outputs, H_final, C_final))

    # Verify against pure-JAX reference.
    ref_out, ref_H, ref_C = _reference_lstm(X, W_x, W_h, b)
    assert jnp.allclose(outputs, ref_out, atol=1e-5, rtol=1e-5)
    assert jnp.allclose(H_final, ref_H, atol=1e-5, rtol=1e-5)
    assert jnp.allclose(C_final, ref_C, atol=1e-5, rtol=1e-5)

    print("KERNEL_OK")
</pallas_src>

<mosaic_0001>
module attributes {stable_mosaic.version = 11 : i64} {
  func.func @lstm_kernel(%arg0: i32, %arg1: i32, %arg2: memref<8x8x16xf32, #tpu.memory_space<vmem>>, %arg3: memref<16x128xf32, #tpu.memory_space<vmem>>, %arg4: memref<32x128xf32, #tpu.memory_space<vmem>>, %arg5: memref<1x128xf32, #tpu.memory_space<vmem>>, %arg6: memref<8x8x32xf32, #tpu.memory_space<vmem>>, %arg7: memref<8x32xf32, #tpu.memory_space<vmem>>, %arg8: memref<8x32xf32, #tpu.memory_space<vmem>>, %arg9: memref<8x8x128xf32, #tpu.memory_space<vmem>>, %arg10: memref<8x32xf32, #tpu.memory_space<vmem>>, %arg11: memref<8x32xf32, #tpu.memory_space<vmem>>) attributes {dimension_semantics = [#tpu.dimension_semantics<parallel>, #tpu.dimension_semantics<arbitrary>], iteration_bounds = array<i64: 1, 1>, scalar_prefetch = 0 : i64, scratch_operands = 3 : i64, tpu.core_type = #tpu.core_type<tc>, window_params = [{transform_indices = @transform_0, window_bounds = array<i64: 8, 8, 16>}, {pipeline_mode = #tpu.pipeline_mode<synchronous>, transform_indices = @transform_1, window_bounds = array<i64: 16, 128>}, {pipeline_mode = #tpu.pipeline_mode<synchronous>, transform_indices = @transform_2, window_bounds = array<i64: 32, 128>}, {pipeline_mode = #tpu.pipeline_mode<synchronous>, transform_indices = @transform_3, window_bounds = array<i64: 1, 128>}, {transform_indices = @transform_4, window_bounds = array<i64: 8, 8, 32>}, {transform_indices = @transform_5, window_bounds = array<i64: 8, 32>}, {transform_indices = @transform_6, window_bounds = array<i64: 8, 32>}]} {
    %c0_i32 = arith.constant 0 : i32
    %0 = arith.cmpi eq, %arg1, %c0_i32 : i32
    %1 = arith.extui %0 : i1 to i32
    %c0_i32_0 = arith.constant 0 : i32
    %2 = arith.cmpi ne, %1, %c0_i32_0 : i32
    scf.if %2 {
      %cst_113 = arith.constant 0.000000e+00 : f32
      %293 = vector.broadcast %cst_113 : f32 to vector<8x32xf32>
      %c0_114 = arith.constant 0 : index
      %c0_115 = arith.constant 0 : index
      %294 = vector.load %arg10[%c0_114, %c0_115] : memref<8x32xf32, #tpu.memory_space<vmem>>, vector<8x32xf32>
      tpu.vector_store %arg10[%c0_114, %c0_115], %293 {strides = array<i32>} : memref<8x32xf32, #tpu.memory_space<vmem>>, vector<8x32xf32>,
      %cst_116 = arith.constant 0.000000e+00 : f32
      %295 = vector.broadcast %cst_116 : f32 to vector<8x32xf32>
      %c0_117 = arith.constant 0 : index
      %c0_118 = arith.constant 0 : index
      %296 = vector.load %arg11[%c0_117, %c0_118] : memref<8x32xf32, #tpu.memory_space<vmem>>, vector<8x32xf32>
      tpu.vector_store %arg11[%c0_117, %c0_118], %295 {strides = array<i32>} : memref<8x32xf32, #tpu.memory_space<vmem>>, vector<8x32xf32>,
    } else {
    }
    %c0 = arith.constant 0 : index
    %c0_1 = arith.constant 0 : index
    %3 = vector.load %arg3[%c0, %c0_1] : memref<16x128xf32, #tpu.memory_space<vmem>>, vector<16x128xf32>
    %c0_2 = arith.constant 0 : index
    %c0_3 = arith.constant 0 : index
    %4 = vector.load %arg4[%c0_2, %c0_3] : memref<32x128xf32, #tpu.memory_space<vmem>>, vector<32x128xf32>
    %c0_4 = arith.constant 0 : index
    %c0_5 = arith.constant 0 : index
    %5 = vector.load %arg5[%c0_4, %c0_5] : memref<1x128xf32, #tpu.memory_space<vmem>>, vector<1x128xf32>
    %c0_i32_6 = arith.constant 0 : i32
    %6 = arith.index_cast %c0_i32_6 : i32 to index
    %c0_7 = arith.constant 0 : index
    %c0_8 = arith.constant 0 : index
    %7 = vector.load %arg2[%6, %c0_7, %c0_8] : memref<8x8x16xf32, #tpu.memory_space<vmem>>, vector<1x8x16xf32>
    %8 = vector.shape_cast %7 : vector<1x8x16xf32> to vector<8x16xf32>
    %cst = arith.constant dense<0.000000e+00> : vector<8x128xf32>
    %9 = tpu.matmul %8, %3, %cst {dimension_numbers = #tpu.dot_dimension_numbers<[1], [0], [0], [1], [0, 0, 1, 1], [], []>} : vector<8x16xf32>, vector<16x128xf32>, vector<8x128xf32> -> vector<8x128xf32>
    %10 = vector.broadcast %5 : vector<1x128xf32> to vector<8x128xf32>
    %11 = arith.addf %9, %10 : vector<8x128xf32>
    %12 = arith.index_cast %c0_i32_6 : i32 to index
    %c0_9 = arith.constant 0 : index
    %c0_10 = arith.constant 0 : index
    %13 = vector.load %arg9[%12, %c0_9, %c0_10] : memref<8x8x128xf32, #tpu.memory_space<vmem>>, vector<1x8x128xf32>
    %14 = vector.shape_cast %13 : vector<1x8x128xf32> to vector<8x128xf32>
    %15 = vector.shape_cast %11 : vector<8x128xf32> to vector<1x8x128xf32>
    tpu.vector_store %arg9[%12, %c0_9, %c0_10], %15 {strides = array<i32>} : memref<8x8x128xf32, #tpu.memory_space<vmem>>, vector<1x8x128xf32>,
    %c1_i32 = arith.constant 1 : i32
    %16 = arith.index_cast %c1_i32 : i32 to index
    %c0_11 = arith.constant 0 : index
    %c0_12 = arith.constant 0 : index
    %17 = vector.load %arg2[%16, %c0_11, %c0_12] : memref<8x8x16xf32, #tpu.memory_space<vmem>>, vector<1x8x16xf32>
    %18 = vector.shape_cast %17 : vector<1x8x16xf32> to vector<8x16xf32>
    %cst_13 = arith.constant dense<0.000000e+00> : vector<8x128xf32>
    %19 = tpu.matmul %18, %3, %cst_13 {dimension_numbers = #tpu.dot_dimension_numbers<[1], [0], [0], [1], [0, 0, 1, 1], [], []>} : vector<8x16xf32>, vector<16x128xf32>, vector<8x128xf32> -> vector<8x128xf32>
    %20 = vector.broadcast %5 : vector<1x128xf32> to vector<8x128xf32>
    %21 = arith.addf %19, %20 : vector<8x128xf32>
    %22 = arith.index_cast %c1_i32 : i32 to index
    %c0_14 = arith.constant 0 : index
    %c0_15 = arith.constant 0 : index
    %23 = vector.load %arg9[%22, %c0_14, %c0_15] : memref<8x8x128xf32, #tpu.memory_space<vmem>>, vector<1x8x128xf32>
    %24 = vector.shape_cast %23 : vector<1x8x128xf32> to vector<8x128xf32>
    %25 = vector.shape_cast %21 : vector<8x128xf32> to vector<1x8x128xf32>
    tpu.vector_store %arg9[%22, %c0_14, %c0_15], %25 {strides = array<i32>} : memref<8x8x128xf32, #tpu.memory_space<vmem>>, vector<1x8x128xf32>,
    %c2_i32 = arith.constant 2 : i32
    %26 = arith.index_cast %c2_i32 : i32 to index
    %c0_16 = arith.constant 0 : index
    %c0_17 = arith.constant 0 : index
    %27 = vector.load %arg2[%26, %c0_16, %c0_17] : memref<8x8x16xf32, #tpu.memory_space<vmem>>, vector<1x8x16xf32>
    %28 = vector.shape_cast %27 : vector<1x8x16xf32> to vector<8x16xf32>
    %cst_18 = arith.constant dense<0.000000e+00> : vector<8x128xf32>
    %29 = tpu.matmul %28, %3, %cst_18 {dimension_numbers = #tpu.dot_dimension_numbers<[1], [0], [0], [1], [0, 0, 1, 1], [], []>} : vector<8x16xf32>, vector<16x128xf32>, vector<8x128xf32> -> vector<8x128xf32>
    %30 = vector.broadcast %5 : vector<1x128xf32> to vector<8x128xf32>
    %31 = arith.addf %29, %30 : vector<8x128xf32>
    %32 = arith.index_cast %c2_i32 : i32 to index
    %c0_19 = arith.constant 0 : index
    %c0_20 = arith.constant 0 : index
    %33 = vector.load %arg9[%32, %c0_19, %c0_20] : memref<8x8x128xf32, #tpu.memory_space<vmem>>, vector<1x8x128xf32>
    %34 = vector.shape_cast %33 : vector<1x8x128xf32> to vector<8x128xf32>
    %35 = vector.shape_cast %31 : vector<8x128xf32> to vector<1x8x128xf32>
    tpu.vector_store %arg9[%32, %c0_19, %c0_20], %35 {strides = array<i32>} : memref<8x8x128xf32, #tpu.memory_space<vmem>>, vector<1x8x128xf32>,
    %c3_i32 = arith.constant 3 : i32
    %36 = arith.index_cast %c3_i32 : i32 to index
    %c0_21 = arith.constant 0 : index
    %c0_22 = arith.constant 0 : index
    %37 = vector.load %arg2[%36, %c0_21, %c0_22] : memref<8x8x16xf32, #tpu.memory_space<vmem>>, vector<1x8x16xf32>
    %38 = vector.shape_cast %37 : vector<1x8x16xf32> to vector<8x16xf32>
    %cst_23 = arith.constant dense<0.000000e+00> : vector<8x128xf32>
    %39 = tpu.matmul %38, %3, %cst_23 {dimension_numbers = #tpu.dot_dimension_numbers<[1], [0], [0], [1], [0, 0, 1, 1], [], []>} : vector<8x16xf32>, vector<16x128xf32>, vector<8x128xf32> -> vector<8x128xf32>
    %40 = vector.broadcast %5 : vector<1x128xf32> to vector<8x128xf32>
    %41 = arith.addf %39, %40 : vector<8x128xf32>
    %42 = arith.index_cast %c3_i32 : i32 to index
    %c0_24 = arith.constant 0 : index
    %c0_25 = arith.constant 0 : index
    %43 = vector.load %arg9[%42, %c0_24, %c0_25] : memref<8x8x128xf32, #tpu.memory_space<vmem>>, vector<1x8x128xf32>
    %44 = vector.shape_cast %43 : vector<1x8x128xf32> to vector<8x128xf32>
    %45 = vector.shape_cast %41 : vector<8x128xf32> to vector<1x8x128xf32>
    tpu.vector_store %arg9[%42, %c0_24, %c0_25], %45 {strides = array<i32>} : memref<8x8x128xf32, #tpu.memory_space<vmem>>, vector<1x8x128xf32>,
    %c4_i32 = arith.constant 4 : i32
    %46 = arith.index_cast %c4_i32 : i32 to index
    %c0_26 = arith.constant 0 : index
    %c0_27 = arith.constant 0 : index
    %47 = vector.load %arg2[%46, %c0_26, %c0_27] : memref<8x8x16xf32, #tpu.memory_space<vmem>>, vector<1x8x16xf32>
    %48 = vector.shape_cast %47 : vector<1x8x16xf32> to vector<8x16xf32>
    %cst_28 = arith.constant dense<0.000000e+00> : vector<8x128xf32>
    %49 = tpu.matmul %48, %3, %cst_28 {dimension_numbers = #tpu.dot_dimension_numbers<[1], [0], [0], [1], [0, 0, 1, 1], [], []>} : vector<8x16xf32>, vector<16x128xf32>, vector<8x128xf32> -> vector<8x128xf32>
    %50 = vector.broadcast %5 : vector<1x128xf32> to vector<8x128xf32>
    %51 = arith.addf %49, %50 : vector<8x128xf32>
    %52 = arith.index_cast %c4_i32 : i32 to index
    %c0_29 = arith.constant 0 : index
    %c0_30 = arith.constant 0 : index
    %53 = vector.load %arg9[%52, %c0_29, %c0_30] : memref<8x8x128xf32, #tpu.memory_space<vmem>>, vector<1x8x128xf32>
    %54 = vector.shape_cast %53 : vector<1x8x128xf32> to vector<8x128xf32>
    %55 = vector.shape_cast %51 : vector<8x128xf32> to vector<1x8x128xf32>
    tpu.vector_store %arg9[%52, %c0_29, %c0_30], %55 {strides = array<i32>} : memref<8x8x128xf32, #tpu.memory_space<vmem>>, vector<1x8x128xf32>,
    %c5_i32 = arith.constant 5 : i32
    %56 = arith.index_cast %c5_i32 : i32 to index
    %c0_31 = arith.constant 0 : index
    %c0_32 = arith.constant 0 : index
    %57 = vector.load %arg2[%56, %c0_31, %c0_32] : memref<8x8x16xf32, #tpu.memory_space<vmem>>, vector<1x8x16xf32>
    %58 = vector.shape_cast %57 : vector<1x8x16xf32> to vector<8x16xf32>
    %cst_33 = arith.constant dense<0.000000e+00> : vector<8x128xf32>
    %59 = tpu.matmul %58, %3, %cst_33 {dimension_numbers = #tpu.dot_dimension_numbers<[1], [0], [0], [1], [0, 0, 1, 1], [], []>} : vector<8x16xf32>, vector<16x128xf32>, vector<8x128xf32> -> vector<8x128xf32>
    %60 = vector.broadcast %5 : vector<1x128xf32> to vector<8x128xf32>
    %61 = arith.addf %59, %60 : vector<8x128xf32>
    %62 = arith.index_cast %c5_i32 : i32 to index
    %c0_34 = arith.constant 0 : index
    %c0_35 = arith.constant 0 : index
    %63 = vector.load %arg9[%62, %c0_34, %c0_35] : memref<8x8x128xf32, #tpu.memory_space<vmem>>, vector<1x8x128xf32>
    %64 = vector.shape_cast %63 : vector<1x8x128xf32> to vector<8x128xf32>
    %65 = vector.shape_cast %61 : vector<8x128xf32> to vector<1x8x128xf32>
    tpu.vector_store %arg9[%62, %c0_34, %c0_35], %65 {strides = array<i32>} : memref<8x8x128xf32, #tpu.memory_space<vmem>>, vector<1x8x128xf32>,
    %c6_i32 = arith.constant 6 : i32
    %66 = arith.index_cast %c6_i32 : i32 to index
    %c0_36 = arith.constant 0 : index
    %c0_37 = arith.constant 0 : index
    %67 = vector.load %arg2[%66, %c0_36, %c0_37] : memref<8x8x16xf32, #tpu.memory_space<vmem>>, vector<1x8x16xf32>
    %68 = vector.shape_cast %67 : vector<1x8x16xf32> to vector<8x16xf32>
    %cst_38 = arith.constant dense<0.000000e+00> : vector<8x128xf32>
    %69 = tpu.matmul %68, %3, %cst_38 {dimension_numbers = #tpu.dot_dimension_numbers<[1], [0], [0], [1], [0, 0, 1, 1], [], []>} : vector<8x16xf32>, vector<16x128xf32>, vector<8x128xf32> -> vector<8x128xf32>
    %70 = vector.broadcast %5 : vector<1x128xf32> to vector<8x128xf32>
    %71 = arith.addf %69, %70 : vector<8x128xf32>
    %72 = arith.index_cast %c6_i32 : i32 to index
    %c0_39 = arith.constant 0 : index
    %c0_40 = arith.constant 0 : index
    %73 = vector.load %arg9[%72, %c0_39, %c0_40] : memref<8x8x128xf32, #tpu.memory_space<vmem>>, vector<1x8x128xf32>
    %74 = vector.shape_cast %73 : vector<1x8x128xf32> to vector<8x128xf32>
    %75 = vector.shape_cast %71 : vector<8x128xf32> to vector<1x8x128xf32>
    tpu.vector_store %arg9[%72, %c0_39, %c0_40], %75 {strides = array<i32>} : memref<8x8x128xf32, #tpu.memory_space<vmem>>, vector<1x8x128xf32>,
    %c7_i32 = arith.constant 7 : i32
    %76 = arith.index_cast %c7_i32 : i32 to index
    %c0_41 = arith.constant 0 : index
    %c0_42 = arith.constant 0 : index
    %77 = vector.load %arg2[%76, %c0_41, %c0_42] : memref<8x8x16xf32, #tpu.memory_space<vmem>>, vector<1x8x16xf32>
    %78 = vector.shape_cast %77 : vector<1x8x16xf32> to vector<8x16xf32>
    %cst_43 = arith.constant dense<0.000000e+00> : vector<8x128xf32>
    %79 = tpu.matmul %78, %3, %cst_43 {dimension_numbers = #tpu.dot_dimension_numbers<[1], [0], [0], [1], [0, 0, 1, 1], [], []>} : vector<8x16xf32>, vector<16x128xf32>, vector<8x128xf32> -> vector<8x128xf32>
    %80 = vector.broadcast %5 : vector<1x128xf32> to vector<8x128xf32>
    %81 = arith.addf %79, %80 : vector<8x128xf32>
    %82 = arith.index_cast %c7_i32 : i32 to index
    %c0_44 = arith.constant 0 : index
    %c0_45 = arith.constant 0 : index
    %83 = vector.load %arg9[%82, %c0_44, %c0_45] : memref<8x8x128xf32, #tpu.memory_space<vmem>>, vector<1x8x128xf32>
    %84 = vector.shape_cast %83 : vector<1x8x128xf32> to vector<8x128xf32>
    %85 = vector.shape_cast %81 : vector<8x128xf32> to vector<1x8x128xf32>
    tpu.vector_store %arg9[%82, %c0_44, %c0_45], %85 {strides = array<i32>} : memref<8x8x128xf32, #tpu.memory_space<vmem>>, vector<1x8x128xf32>,
    %c8_i32 = arith.constant 8 : i32
    %c0_46 = arith.constant 0 : index
    %c0_47 = arith.constant 0 : index
    %86 = vector.load %arg10[%c0_46, %c0_47] : memref<8x32xf32, #tpu.memory_space<vmem>>, vector<8x32xf32>
    %c0_48 = arith.constant 0 : index
    %c0_49 = arith.constant 0 : index
    %87 = vector.load %arg11[%c0_48, %c0_49] : memref<8x32xf32, #tpu.memory_space<vmem>>, vector<8x32xf32>
    %c0_i32_50 = arith.constant 0 : i32
    %88 = arith.index_cast %c0_i32_50 : i32 to index
    %c0_51 = arith.constant 0 : index
    %c0_52 = arith.constant 0 : index
    %89 = vector.load %arg9[%88, %c0_51, %c0_52] : memref<8x8x128xf32, #tpu.memory_space<vmem>>, vector<1x8x128xf32>
    %90 = vector.shape_cast %89 : vector<1x8x128xf32> to vector<8x128xf32>
    %cst_53 = arith.constant dense<0.000000e+00> : vector<8x128xf32>
    %91 = tpu.matmul %86, %4, %cst_53 {dimension_numbers = #tpu.dot_dimension_numbers<[1], [0], [0], [1], [0, 0, 1, 1], [], []>} : vector<8x32xf32>, vector<32x128xf32>, vector<8x128xf32> -> vector<8x128xf32>
    %92 = arith.addf %90, %91 : vector<8x128xf32>
    %93 = vector.extract_strided_slice %92 {offsets = [0, 0], sizes = [8, 96], strides = [1, 1]} : vector<8x128xf32> to vector<8x96xf32>
    %94 = arith.negf %93 : vector<8x96xf32>
    %95 = math.exp %94 : vector<8x96xf32>
    %cst_54 = arith.constant 1.000000e+00 : f32
    %96 = vector.broadcast %cst_54 : f32 to vector<8x96xf32>
    %97 = arith.addf %96, %95 : vector<8x96xf32>
    %98 = arith.divf %96, %97 : vector<8x96xf32>
    %99 = vector.extract_strided_slice %98 {offsets = [0, 0], sizes = [8, 32], strides = [1, 1]} : vector<8x96xf32> to vector<8x32xf32>
    %100 = vector.extract_strided_slice %98 {offsets = [0, 32], sizes = [8, 32], strides = [1, 1]} : vector<8x96xf32> to vector<8x32xf32>
    %101 = vector.extract_strided_slice %98 {offsets = [0, 64], sizes = [8, 32], strides = [1, 1]} : vector<8x96xf32> to vector<8x32xf32>
    %102 = vector.extract_strided_slice %92 {offsets = [0, 96], sizes = [8, 32], strides = [1, 1]} : vector<8x128xf32> to vector<8x32xf32>
    %103 = math.tanh %102 : vector<8x32xf32>
    %104 = arith.mulf %100, %87 : vector<8x32xf32>
    %105 = arith.mulf %99, %103 : vector<8x32xf32>
    %106 = arith.addf %104, %105 : vector<8x32xf32>
    %107 = math.tanh %106 : vector<8x32xf32>
    %108 = arith.mulf %101, %107 : vector<8x32xf32>
    %109 = arith.index_cast %c0_i32_50 : i32 to index
    %c0_55 = arith.constant 0 : index
    %c0_56 = arith.constant 0 : index
    %110 = vector.load %arg6[%109, %c0_55, %c0_56] : memref<8x8x32xf32, #tpu.memory_space<vmem>>, vector<1x8x32xf32>
    %111 = vector.shape_cast %110 : vector<1x8x32xf32> to vector<8x32xf32>
    %112 = vector.shape_cast %108 : vector<8x32xf32> to vector<1x8x32xf32>
    tpu.vector_store %arg6[%109, %c0_55, %c0_56], %112 {strides = array<i32>} : memref<8x8x32xf32, #tpu.memory_space<vmem>>, vector<1x8x32xf32>,
    %c1_i32_57 = arith.constant 1 : i32
    %113 = arith.index_cast %c1_i32_57 : i32 to index
    %c0_58 = arith.constant 0 : index
    %c0_59 = arith.constant 0 : index
    %114 = vector.load %arg9[%113, %c0_58, %c0_59] : memref<8x8x128xf32, #tpu.memory_space<vmem>>, vector<1x8x128xf32>
    %115 = vector.shape_cast %114 : vector<1x8x128xf32> to vector<8x128xf32>
    %cst_60 = arith.constant dense<0.000000e+00> : vector<8x128xf32>
    %116 = tpu.matmul %108, %4, %cst_60 {dimension_numbers = #tpu.dot_dimension_numbers<[1], [0], [0], [1], [0, 0, 1, 1], [], []>} : vector<8x32xf32>, vector<32x128xf32>, vector<8x128xf32> -> vector<8x128xf32>
    %117 = arith.addf %115, %116 : vector<8x128xf32>
    %118 = vector.extract_strided_slice %117 {offsets = [0, 0], sizes = [8, 96], strides = [1, 1]} : vector<8x128xf32> to vector<8x96xf32>
    %119 = arith.negf %118 : vector<8x96xf32>
    %120 = math.exp %119 : vector<8x96xf32>
    %cst_61 = arith.constant 1.000000e+00 : f32
    %121 = vector.broadcast %cst_61 : f32 to vector<8x96xf32>
    %122 = arith.addf %121, %120 : vector<8x96xf32>
    %123 = arith.divf %121, %122 : vector<8x96xf32>
    %124 = vector.extract_strided_slice %123 {offsets = [0, 0], sizes = [8, 32], strides = [1, 1]} : vector<8x96xf32> to vector<8x32xf32>
    %125 = vector.extract_strided_slice %123 {offsets = [0, 32], sizes = [8, 32], strides = [1, 1]} : vector<8x96xf32> to vector<8x32xf32>
    %126 = vector.extract_strided_slice %123 {offsets = [0, 64], sizes = [8, 32], strides = [1, 1]} : vector<8x96xf32> to vector<8x32xf32>
    %127 = vector.extract_strided_slice %117 {offsets = [0, 96], sizes = [8, 32], strides = [1, 1]} : vector<8x128xf32> to vector<8x32xf32>
    %128 = math.tanh %127 : vector<8x32xf32>
    %129 = arith.mulf %125, %106 : vector<8x32xf32>
    %130 = arith.mulf %124, %128 : vector<8x32xf32>
    %131 = arith.addf %129, %130 : vector<8x32xf32>
    %132 = math.tanh %131 : vector<8x32xf32>
    %133 = arith.mulf %126, %132 : vector<8x32xf32>
    %134 = arith.index_cast %c1_i32_57 : i32 to index
    %c0_62 = arith.constant 0 : index
    %c0_63 = arith.constant 0 : index
    %135 = vector.load %arg6[%134, %c0_62, %c0_63] : memref<8x8x32xf32, #tpu.memory_space<vmem>>, vector<1x8x32xf32>
    %136 = vector.shape_cast %135 : vector<1x8x32xf32> to vector<8x32xf32>
    %137 = vector.shape_cast %133 : vector<8x32xf32> to vector<1x8x32xf32>
    tpu.vector_store %arg6[%134, %c0_62, %c0_63], %137 {strides = array<i32>} : memref<8x8x32xf32, #tpu.memory_space<vmem>>, vector<1x8x32xf32>,
    %c2_i32_64 = arith.constant 2 : i32
    %138 = arith.index_cast %c2_i32_64 : i32 to index
    %c0_65 = arith.constant 0 : index
    %c0_66 = arith.constant 0 : index
    %139 = vector.load %arg9[%138, %c0_65, %c0_66] : memref<8x8x128xf32, #tpu.memory_space<vmem>>, vector<1x8x128xf32>
    %140 = vector.shape_cast %139 : vector<1x8x128xf32> to vector<8x128xf32>
    %cst_67 = arith.constant dense<0.000000e+00> : vector<8x128xf32>
    %141 = tpu.matmul %133, %4, %cst_67 {dimension_numbers = #tpu.dot_dimension_numbers<[1], [0], [0], [1], [0, 0, 1, 1], [], []>} : vector<8x32xf32>, vector<32x128xf32>, vector<8x128xf32> -> vector<8x128xf32>
    %142 = arith.addf %140, %141 : vector<8x128xf32>
    %143 = vector.extract_strided_slice %142 {offsets = [0, 0], sizes = [8, 96], strides = [1, 1]} : vector<8x128xf32> to vector<8x96xf32>
    %144 = arith.negf %143 : vector<8x96xf32>
    %145 = math.exp %144 : vector<8x96xf32>
    %cst_68 = arith.constant 1.000000e+00 : f32
    %146 = vector.broadcast %cst_68 : f32 to vector<8x96xf32>
    %147 = arith.addf %146, %145 : vector<8x96xf32>
    %148 = arith.divf %146, %147 : vector<8x96xf32>
    %149 = vector.extract_strided_slice %148 {offsets = [0, 0], sizes = [8, 32], strides = [1, 1]} : vector<8x96xf32> to vector<8x32xf32>
    %150 = vector.extract_strided_slice %148 {offsets = [0, 32], sizes = [8, 32], strides = [1, 1]} : vector<8x96xf32> to vector<8x32xf32>
    %151 = vector.extract_strided_slice %148 {offsets = [0, 64], sizes = [8, 32], strides = [1, 1]} : vector<8x96xf32> to vector<8x32xf32>
    %152 = vector.extract_strided_slice %142 {offsets = [0, 96], sizes = [8, 32], strides = [1, 1]} : vector<8x128xf32> to vector<8x32xf32>
    %153 = math.tanh %152 : vector<8x32xf32>
    %154 = arith.mulf %150, %131 : vector<8x32xf32>
    %155 = arith.mulf %149, %153 : vector<8x32xf32>
    %156 = arith.addf %154, %155 : vector<8x32xf32>
    %157 = math.tanh %156 : vector<8x32xf32>
    %158 = arith.mulf %151, %157 : vector<8x32xf32>
    %159 = arith.index_cast %c2_i32_64 : i32 to index
    %c0_69 = arith.constant 0 : index
    %c0_70 = arith.constant 0 : index
    %160 = vector.load %arg6[%159, %c0_69, %c0_70] : memref<8x8x32xf32, #tpu.memory_space<vmem>>, vector<1x8x32xf32>
    %161 = vector.shape_cast %160 : vector<1x8x32xf32> to vector<8x32xf32>
    %162 = vector.shape_cast %158 : vector<8x32xf32> to vector<1x8x32xf32>
    tpu.vector_store %arg6[%159, %c0_69, %c0_70], %162 {strides = array<i32>} : memref<8x8x32xf32, #tpu.memory_space<vmem>>, vector<1x8x32xf32>,
    %c3_i32_71 = arith.constant 3 : i32
    %163 = arith.index_cast %c3_i32_71 : i32 to index
    %c0_72 = arith.constant 0 : index
    %c0_73 = arith.constant 0 : index
    %164 = vector.load %arg9[%163, %c0_72, %c0_73] : memref<8x8x128xf32, #tpu.memory_space<vmem>>, vector<1x8x128xf32>
    %165 = vector.shape_cast %164 : vector<1x8x128xf32> to vector<8x128xf32>
    %cst_74 = arith.constant dense<0.000000e+00> : vector<8x128xf32>
    %166 = tpu.matmul %158, %4, %cst_74 {dimension_numbers = #tpu.dot_dimension_numbers<[1], [0], [0], [1], [0, 0, 1, 1], [], []>} : vector<8x32xf32>, vector<32x128xf32>, vector<8x128xf32> -> vector<8x128xf32>
    %167 = arith.addf %165, %166 : vector<8x128xf32>
    %168 = vector.extract_strided_slice %167 {offsets = [0, 0], sizes = [8, 96], strides = [1, 1]} : vector<8x128xf32> to vector<8x96xf32>
    %169 = arith.negf %168 : vector<8x96xf32>
    %170 = math.exp %169 : vector<8x96xf32>
    %cst_75 = arith.constant 1.000000e+00 : f32
    %171 = vector.broadcast %cst_75 : f32 to vector<8x96xf32>
    %172 = arith.addf %171, %170 : vector<8x96xf32>
    %173 = arith.divf %171, %172 : vector<8x96xf32>
    %174 = vector.extract_strided_slice %173 {offsets = [0, 0], sizes = [8, 32], strides = [1, 1]} : vector<8x96xf32> to vector<8x32xf32>
    %175 = vector.extract_strided_slice %173 {offsets = [0, 32], sizes = [8, 32], strides = [1, 1]} : vector<8x96xf32> to vector<8x32xf32>
    %176 = vector.extract_strided_slice %173 {offsets = [0, 64], sizes = [8, 32], strides = [1, 1]} : vector<8x96xf32> to vector<8x32xf32>
    %177 = vector.extract_strided_slice %167 {offsets = [0, 96], sizes = [8, 32], strides = [1, 1]} : vector<8x128xf32> to vector<8x32xf32>
    %178 = math.tanh %177 : vector<8x32xf32>
    %179 = arith.mulf %175, %156 : vector<8x32xf32>
    %180 = arith.mulf %174, %178 : vector<8x32xf32>
    %181 = arith.addf %179, %180 : vector<8x32xf32>
    %182 = math.tanh %181 : vector<8x32xf32>
    %183 = arith.mulf %176, %182 : vector<8x32xf32>
    %184 = arith.index_cast %c3_i32_71 : i32 to index
    %c0_76 = arith.constant 0 : index
    %c0_77 = arith.constant 0 : index
    %185 = vector.load %arg6[%184, %c0_76, %c0_77] : memref<8x8x32xf32, #tpu.memory_space<vmem>>, vector<1x8x32xf32>
    %186 = vector.shape_cast %185 : vector<1x8x32xf32> to vector<8x32xf32>
    %187 = vector.shape_cast %183 : vector<8x32xf32> to vector<1x8x32xf32>
    tpu.vector_store %arg6[%184, %c0_76, %c0_77], %187 {strides = array<i32>} : memref<8x8x32xf32, #tpu.memory_space<vmem>>, vector<1x8x32xf32>,
    %c4_i32_78 = arith.constant 4 : i32
    %188 = arith.index_cast %c4_i32_78 : i32 to index
    %c0_79 = arith.constant 0 : index
    %c0_80 = arith.constant 0 : index
    %189 = vector.load %arg9[%188, %c0_79, %c0_80] : memref<8x8x128xf32, #tpu.memory_space<vmem>>, vector<1x8x128xf32>
    %190 = vector.shape_cast %189 : vector<1x8x128xf32> to vector<8x128xf32>
    %cst_81 = arith.constant dense<0.000000e+00> : vector<8x128xf32>
    %191 = tpu.matmul %183, %4, %cst_81 {dimension_numbers = #tpu.dot_dimension_numbers<[1], [0], [0], [1], [0, 0, 1, 1], [], []>} : vector<8x32xf32>, vector<32x128xf32>, vector<8x128xf32> -> vector<8x128xf32>
    %192 = arith.addf %190, %191 : vector<8x128xf32>
    %193 = vector.extract_strided_slice %192 {offsets = [0, 0], sizes = [8, 96], strides = [1, 1]} : vector<8x128xf32> to vector<8x96xf32>
    %194 = arith.negf %193 : vector<8x96xf32>
    %195 = math.exp %194 : vector<8x96xf32>
    %cst_82 = arith.constant 1.000000e+00 : f32
    %196 = vector.broadcast %cst_82 : f32 to vector<8x96xf32>
    %197 = arith.addf %196, %195 : vector<8x96xf32>
    %198 = arith.divf %196, %197 : vector<8x96xf32>
    %199 = vector.extract_strided_slice %198 {offsets = [0, 0], sizes = [8, 32], strides = [1, 1]} : vector<8x96xf32> to vector<8x32xf32>
    %200 = vector.extract_strided_slice %198 {offsets = [0, 32], sizes = [8, 32], strides = [1, 1]} : vector<8x96xf32> to vector<8x32xf32>
    %201 = vector.extract_strided_slice %198 {offsets = [0, 64], sizes = [8, 32], strides = [1, 1]} : vector<8x96xf32> to vector<8x32xf32>
    %202 = vector.extract_strided_slice %192 {offsets = [0, 96], sizes = [8, 32], strides = [1, 1]} : vector<8x128xf32> to vector<8x32xf32>
    %203 = math.tanh %202 : vector<8x32xf32>
    %204 = arith.mulf %200, %181 : vector<8x32xf32>
    %205 = arith.mulf %199, %203 : vector<8x32xf32>
    %206 = arith.addf %204, %205 : vector<8x32xf32>
    %207 = math.tanh %206 : vector<8x32xf32>
    %208 = arith.mulf %201, %207 : vector<8x32xf32>
    %209 = arith.index_cast %c4_i32_78 : i32 to index
    %c0_83 = arith.constant 0 : index
    %c0_84 = arith.constant 0 : index
    %210 = vector.load %arg6[%209, %c0_83, %c0_84] : memref<8x8x32xf32, #tpu.memory_space<vmem>>, vector<1x8x32xf32>
    %211 = vector.shape_cast %210 : vector<1x8x32xf32> to vector<8x32xf32>
    %212 = vector.shape_cast %208 : vector<8x32xf32> to vector<1x8x32xf32>
    tpu.vector_store %arg6[%209, %c0_83, %c0_84], %212 {strides = array<i32>} : memref<8x8x32xf32, #tpu.memory_space<vmem>>, vector<1x8x32xf32>,
    %c5_i32_85 = arith.constant 5 : i32
    %213 = arith.index_cast %c5_i32_85 : i32 to index
    %c0_86 = arith.constant 0 : index
    %c0_87 = arith.constant 0 : index
    %214 = vector.load %arg9[%213, %c0_86, %c0_87] : memref<8x8x128xf32, #tpu.memory_space<vmem>>, vector<1x8x128xf32>
    %215 = vector.shape_cast %214 : vector<1x8x128xf32> to vector<8x128xf32>
    %cst_88 = arith.constant dense<0.000000e+00> : vector<8x128xf32>
    %216 = tpu.matmul %208, %4, %cst_88 {dimension_numbers = #tpu.dot_dimension_numbers<[1], [0], [0], [1], [0, 0, 1, 1], [], []>} : vector<8x32xf32>, vector<32x128xf32>, vector<8x128xf32> -> vector<8x128xf32>
    %217 = arith.addf %215, %216 : vector<8x128xf32>
    %218 = vector.extract_strided_slice %217 {offsets = [0, 0], sizes = [8, 96], strides = [1, 1]} : vector<8x128xf32> to vector<8x96xf32>
    %219 = arith.negf %218 : vector<8x96xf32>
    %220 = math.exp %219 : vector<8x96xf32>
    %cst_89 = arith.constant 1.000000e+00 : f32
    %221 = vector.broadcast %cst_89 : f32 to vector<8x96xf32>
    %222 = arith.addf %221, %220 : vector<8x96xf32>
    %223 = arith.divf %221, %222 : vector<8x96xf32>
    %224 = vector.extract_strided_slice %223 {offsets = [0, 0], sizes = [8, 32], strides = [1, 1]} : vector<8x96xf32> to vector<8x32xf32>
    %225 = vector.extract_strided_slice %223 {offsets = [0, 32], sizes = [8, 32], strides = [1, 1]} : vector<8x96xf32> to vector<8x32xf32>
    %226 = vector.extract_strided_slice %223 {offsets = [0, 64], sizes = [8, 32], strides = [1, 1]} : vector<8x96xf32> to vector<8x32xf32>
    %227 = vector.extract_strided_slice %217 {offsets = [0, 96], sizes = [8, 32], strides = [1, 1]} : vector<8x128xf32> to vector<8x32xf32>
    %228 = math.tanh %227 : vector<8x32xf32>
    %229 = arith.mulf %225, %206 : vector<8x32xf32>
    %230 = arith.mulf %224, %228 : vector<8x32xf32>
    %231 = arith.addf %229, %230 : vector<8x32xf32>
    %232 = math.tanh %231 : vector<8x32xf32>
    %233 = arith.mulf %226, %232 : vector<8x32xf32>
    %234 = arith.index_cast %c5_i32_85 : i32 to index
    %c0_90 = arith.constant 0 : index
    %c0_91 = arith.constant 0 : index
    %235 = vector.load %arg6[%234, %c0_90, %c0_91] : memref<8x8x32xf32, #tpu.memory_space<vmem>>, vector<1x8x32xf32>
    %236 = vector.shape_cast %235 : vector<1x8x32xf32> to vector<8x32xf32>
    %237 = vector.shape_cast %233 : vector<8x32xf32> to vector<1x8x32xf32>
    tpu.vector_store %arg6[%234, %c0_90, %c0_91], %237 {strides = array<i32>} : memref<8x8x32xf32, #tpu.memory_space<vmem>>, vector<1x8x32xf32>,
    %c6_i32_92 = arith.constant 6 : i32
    %238 = arith.index_cast %c6_i32_92 : i32 to index
    %c0_93 = arith.constant 0 : index
    %c0_94 = arith.constant 0 : index
    %239 = vector.load %arg9[%238, %c0_93, %c0_94] : memref<8x8x128xf32, #tpu.memory_space<vmem>>, vector<1x8x128xf32>
    %240 = vector.shape_cast %239 : vector<1x8x128xf32> to vector<8x128xf32>
    %cst_95 = arith.constant dense<0.000000e+00> : vector<8x128xf32>
    %241 = tpu.matmul %233, %4, %cst_95 {dimension_numbers = #tpu.dot_dimension_numbers<[1], [0], [0], [1], [0, 0, 1, 1], [], []>} : vector<8x32xf32>, vector<32x128xf32>, vector<8x128xf32> -> vector<8x128xf32>
    %242 = arith.addf %240, %241 : vector<8x128xf32>
    %243 = vector.extract_strided_slice %242 {offsets = [0, 0], sizes = [8, 96], strides = [1, 1]} : vector<8x128xf32> to vector<8x96xf32>
    %244 = arith.negf %243 : vector<8x96xf32>
    %245 = math.exp %244 : vector<8x96xf32>
    %cst_96 = arith.constant 1.000000e+00 : f32
    %246 = vector.broadcast %cst_96 : f32 to vector<8x96xf32>
    %247 = arith.addf %246, %245 : vector<8x96xf32>
    %248 = arith.divf %246, %247 : vector<8x96xf32>
    %249 = vector.extract_strided_slice %248 {offsets = [0, 0], sizes = [8, 32], strides = [1, 1]} : vector<8x96xf32> to vector<8x32xf32>
    %250 = vector.extract_strided_slice %248 {offsets = [0, 32], sizes = [8, 32], strides = [1, 1]} : vector<8x96xf32> to vector<8x32xf32>
    %251 = vector.extract_strided_slice %248 {offsets = [0, 64], sizes = [8, 32], strides = [1, 1]} : vector<8x96xf32> to vector<8x32xf32>
    %252 = vector.extract_strided_slice %242 {offsets = [0, 96], sizes = [8, 32], strides = [1, 1]} : vector<8x128xf32> to vector<8x32xf32>
    %253 = math.tanh %252 : vector<8x32xf32>
    %254 = arith.mulf %250, %231 : vector<8x32xf32>
    %255 = arith.mulf %249, %253 : vector<8x32xf32>
    %256 = arith.addf %254, %255 : vector<8x32xf32>
    %257 = math.tanh %256 : vector<8x32xf32>
    %258 = arith.mulf %251, %257 : vector<8x32xf32>
    %259 = arith.index_cast %c6_i32_92 : i32 to index
    %c0_97 = arith.constant 0 : index
    %c0_98 = arith.constant 0 : index
    %260 = vector.load %arg6[%259, %c0_97, %c0_98] : memref<8x8x32xf32, #tpu.memory_space<vmem>>, vector<1x8x32xf32>
    %261 = vector.shape_cast %260 : vector<1x8x32xf32> to vector<8x32xf32>
    %262 = vector.shape_cast %258 : vector<8x32xf32> to vector<1x8x32xf32>
    tpu.vector_store %arg6[%259, %c0_97, %c0_98], %262 {strides = array<i32>} : memref<8x8x32xf32, #tpu.memory_space<vmem>>, vector<1x8x32xf32>,
    %c7_i32_99 = arith.constant 7 : i32
    %263 = arith.index_cast %c7_i32_99 : i32 to index
    %c0_100 = arith.constant 0 : index
    %c0_101 = arith.constant 0 : index
    %264 = vector.load %arg9[%263, %c0_100, %c0_101] : memref<8x8x128xf32, #tpu.memory_space<vmem>>, vector<1x8x128xf32>
    %265 = vector.shape_cast %264 : vector<1x8x128xf32> to vector<8x128xf32>
    %cst_102 = arith.constant dense<0.000000e+00> : vector<8x128xf32>
    %266 = tpu.matmul %258, %4, %cst_102 {dimension_numbers = #tpu.dot_dimension_numbers<[1], [0], [0], [1], [0, 0, 1, 1], [], []>} : vector<8x32xf32>, vector<32x128xf32>, vector<8x128xf32> -> vector<8x128xf32>
    %267 = arith.addf %265, %266 : vector<8x128xf32>
    %268 = vector.extract_strided_slice %267 {offsets = [0, 0], sizes = [8, 96], strides = [1, 1]} : vector<8x128xf32> to vector<8x96xf32>
    %269 = arith.negf %268 : vector<8x96xf32>
    %270 = math.exp %269 : vector<8x96xf32>
    %cst_103 = arith.constant 1.000000e+00 : f32
    %271 = vector.broadcast %cst_103 : f32 to vector<8x96xf32>
    %272 = arith.addf %271, %270 : vector<8x96xf32>
    %273 = arith.divf %271, %272 : vector<8x96xf32>
    %274 = vector.extract_strided_slice %273 {offsets = [0, 0], sizes = [8, 32], strides = [1, 1]} : vector<8x96xf32> to vector<8x32xf32>
    %275 = vector.extract_strided_slice %273 {offsets = [0, 32], sizes = [8, 32], strides = [1, 1]} : vector<8x96xf32> to vector<8x32xf32>
    %276 = vector.extract_strided_slice %273 {offsets = [0, 64], sizes = [8, 32], strides = [1, 1]} : vector<8x96xf32> to vector<8x32xf32>
    %277 = vector.extract_strided_slice %267 {offsets = [0, 96], sizes = [8, 32], strides = [1, 1]} : vector<8x128xf32> to vector<8x32xf32>
    %278 = math.tanh %277 : vector<8x32xf32>
    %279 = arith.mulf %275, %256 : vector<8x32xf32>
    %280 = arith.mulf %274, %278 : vector<8x32xf32>
    %281 = arith.addf %279, %280 : vector<8x32xf32>
    %282 = math.tanh %281 : vector<8x32xf32>
    %283 = arith.mulf %276, %282 : vector<8x32xf32>
    %284 = arith.index_cast %c7_i32_99 : i32 to index
    %c0_104 = arith.constant 0 : index
    %c0_105 = arith.constant 0 : index
    %285 = vector.load %arg6[%284, %c0_104, %c0_105] : memref<8x8x32xf32, #tpu.memory_space<vmem>>, vector<1x8x32xf32>
    %286 = vector.shape_cast %285 : vector<1x8x32xf32> to vector<8x32xf32>
    %287 = vector.shape_cast %283 : vector<8x32xf32> to vector<1x8x32xf32>
    tpu.vector_store %arg6[%284, %c0_104, %c0_105], %287 {strides = array<i32>} : memref<8x8x32xf32, #tpu.memory_space<vmem>>, vector<1x8x32xf32>,
    %c8_i32_106 = arith.constant 8 : i32
    %c0_107 = arith.constant 0 : index
    %c0_108 = arith.constant 0 : index
    %288 = vector.load %arg10[%c0_107, %c0_108] : memref<8x32xf32, #tpu.memory_space<vmem>>, vector<8x32xf32>
    tpu.vector_store %arg10[%c0_107, %c0_108], %283 {strides = array<i32>} : memref<8x32xf32, #tpu.memory_space<vmem>>, vector<8x32xf32>,
    %c0_109 = arith.constant 0 : index
    %c0_110 = arith.constant 0 : index
    %289 = vector.load %arg11[%c0_109, %c0_110] : memref<8x32xf32, #tpu.memory_space<vmem>>, vector<8x32xf32>
    tpu.vector_store %arg11[%c0_109, %c0_110], %281 {strides = array<i32>} : memref<8x32xf32, #tpu.memory_space<vmem>>, vector<8x32xf32>,
    %c0_i32_111 = arith.constant 0 : i32
    %290 = arith.cmpi eq, %arg1, %c0_i32_111 : i32
    %291 = arith.extui %290 : i1 to i32
    %c0_i32_112 = arith.constant 0 : i32
    %292 = arith.cmpi ne, %291, %c0_i32_112 : i32
    scf.if %292 {
      %c0_113 = arith.constant 0 : index
      %c0_114 = arith.constant 0 : index
      %293 = vector.load %arg7[%c0_113, %c0_114] : memref<8x32xf32, #tpu.memory_space<vmem>>, vector<8x32xf32>
      tpu.vector_store %arg7[%c0_113, %c0_114], %283 {strides = array<i32>} : memref<8x32xf32, #tpu.memory_space<vmem>>, vector<8x32xf32>,
      %c0_115 = arith.constant 0 : index
      %c0_116 = arith.constant 0 : index
      %294 = vector.load %arg8[%c0_115, %c0_116] : memref<8x32xf32, #tpu.memory_space<vmem>>, vector<8x32xf32>
      tpu.vector_store %arg8[%c0_115, %c0_116], %281 {strides = array<i32>} : memref<8x32xf32, #tpu.memory_space<vmem>>, vector<8x32xf32>,
    } else {
    }
    return
  }
  func.func @transform_0(%arg0: i32, %arg1: i32) -> (i32, i32, i32) {
    %c0_i32 = arith.constant 0 : i32
    %c0_i32_0 = arith.constant 0 : i32
    return %arg1, %arg0, %c0_i32 : i32, i32, i32
  }
  func.func @transform_1(%arg0: i32, %arg1: i32) -> (i32, i32) {
    %c0_i32 = arith.constant 0 : i32
    %c0_i32_0 = arith.constant 0 : i32
    %c0_i32_1 = arith.constant 0 : i32
    return %c0_i32, %c0_i32_0 : i32, i32
  }
  func.func @transform_2(%arg0: i32, %arg1: i32) -> (i32, i32) {
    %c0_i32 = arith.constant 0 : i32
    %c0_i32_0 = arith.constant 0 : i32
    %c0_i32_1 = arith.constant 0 : i32
    return %c0_i32, %c0_i32_0 : i32, i32
  }
  func.func @transform_3(%arg0: i32, %arg1: i32) -> (i32, i32) {
    %c0_i32 = arith.constant 0 : i32
    %c0_i32_0 = arith.constant 0 : i32
    %c0_i32_1 = arith.constant 0 : i32
    return %c0_i32, %c0_i32_0 : i32, i32
  }
  func.func @transform_4(%arg0: i32, %arg1: i32) -> (i32, i32, i32) {
    %c0_i32 = arith.constant 0 : i32
    %c0_i32_0 = arith.constant 0 : i32
    return %arg1, %arg0, %c0_i32 : i32, i32, i32
  }
  func.func @transform_5(%arg0: i32, %arg1: i32) -> (i32, i32) {
    %c0_i32 = arith.constant 0 : i32
    %c0_i32_0 = arith.constant 0 : i32
    return %arg0, %c0_i32 : i32, i32
  }
  func.func @transform_6(%arg0: i32, %arg1: i32) -> (i32, i32) {
    %c0_i32 = arith.constant 0 : i32
    %c0_i32_0 = arith.constant 0 : i32
    return %arg0, %c0_i32 : i32, i32
  }
}

</mosaic_0001>

<llo_original>
// kernel: tpu_custom_call.1
$region0: #{tpu_custom_call.1}
  #allocation0 [shape = 'u32[]', space=smem, size = 0x4, offset = 0x4, fixed_abs, tag = 'smem constant byte address 0x4 - core index']
  #allocation1 [shape = 'u32[144,128]{1,0:T(1,128)}', space=vmem, size = 0x12000, scoped, tag = 'internal scratch']
  #allocation2 [shape = 'f32[8,8,128]{2,1,0:T(8,128)}', space=vmem, size = 0x8000, scoped, tag = 'scratch operand']
  #allocation3 [shape = 'f32[8,32]{1,0:T(8,128)}', space=vmem, size = 0x1000, scoped, tag = 'scratch operand']
  #allocation4 [shape = 'f32[8,32]{1,0:T(8,128)}', space=vmem, size = 0x1000, scoped, tag = 'scratch operand']
  %s0 = inlined_call_operand.hbm [shape: f32[8,8,16], index: 0, kind: input, shape index: {}]
  %s1 = inlined_call_operand.hbm [shape: f32[16,128], index: 1, kind: input, shape index: {}]
  %s2 = inlined_call_operand.hbm [shape: f32[32,128], index: 2, kind: input, shape index: {}]
  %s3 = inlined_call_operand.vmem [shape: f32[1,128], index: 3, kind: input, shape index: {}]
  %s4 = inlined_call_operand.hbm [shape: f32[8,8,32], index: 4, kind: output, shape index: {0}]
  %s5 = inlined_call_operand.hbm [shape: f32[8,32], index: 5, kind: output, shape index: {1}]
  %s6 = inlined_call_operand.hbm [shape: f32[8,32], index: 6, kind: output, shape index: {2}]
  %7 = xla_tuple %s4, %s5, %s6
  %s8 = sld [smem:[#allocation0]]
  $region62: #{tpu_custom_call.1} parent=0
    _
  %s10 = ssub.s32 1, %s8
  %s11 = scalar_select 0, %s10, %s8
  $region1: #{tpu_custom_call.1} parent=0
    #allocation5 [shape = 'u8[32768]{0}', space=vmem, size = 0x8000, scoped, tag = 'input window, operand 0, single buffered']
    #allocation6 [shape = 's32[1]{0}', space=sflag, size = 0x4, scoped, tag = 'scoped memory for tpu_custom_call.1']
    #allocation7 [shape = 's32[1]{0}', space=sflag, size = 0x4, scoped, tag = 'scoped memory for tpu_custom_call.1']
    #allocation8 [shape = 'u8[8192]{0}', space=vmem, size = 0x2000, scoped, tag = 'input window, operand 1, single buffered']
    #allocation9 [shape = 's32[1]{0}', space=sflag, size = 0x4, scoped, tag = 'scoped memory for tpu_custom_call.1']
    #allocation10 [shape = 'u8[16384]{0}', space=vmem, size = 0x4000, scoped, tag = 'input window, operand 2, single buffered']
    #allocation11 [shape = 'u8[32768]{0}', space=vmem, size = 0x8000, scoped, tag = 'output window, operand 0, single buffered']
    #allocation12 [shape = 'u8[4096]{0}', space=vmem, size = 0x1000, scoped, tag = 'output window, operand 1, single buffered']
    #allocation13 [shape = 's32[1]{0}', space=sflag, size = 0x4, scoped, tag = 'scoped memory for tpu_custom_call.1']
    #allocation14 [shape = 'u8[4096]{0}', space=vmem, size = 0x1000, scoped, tag = 'output window, operand 2, single buffered']
    %12 = vsyncpa [#allocation6], 0
    %13 = vsyncpa [#allocation9], 0
    %14 = vsyncpa [#allocation7], 0
    %15 = vsyncpa [#allocation13], 0
    // Predicated region
    $region2: #{tpu_custom_call.1} parent=1 // pred_check
      _
    $region3: #{tpu_custom_call.1} parent=1 // pred_check_branch
      %17 = sbr.rel (0) target = $region5
    $region4: #{tpu_custom_call.1} parent=1 // pred_region
      %s19 = ssub.s32 1024, 1024
      %20 = vsyncadd [#allocation6], %s19
      %s21 = sshll.u32 [#allocation5], 4
      %s22 = int_to_ptr.vmem [resolvable:$true] %s21
      %27 = dma.hbm_to_vmem [thread:$0]  %s0, 1024, %s22, [#allocation6], 128, 128, 8
    $region5: #{tpu_custom_call.1} parent=1 // pred_fallthru
      _
    // Predicated region
    $region6: #{tpu_custom_call.1} parent=1 // pred_check
      _
    $region7: #{tpu_custom_call.1} parent=1 // pred_check_branch
      %29 = sbr.rel (0) target = $region9
    $region8: #{tpu_custom_call.1} parent=1 // pred_region
      %s31 = ssub.s32 256, 256
      %32 = vsyncadd [#allocation9], %s31
      %s33 = sshll.u32 [#allocation8], 4
      %s34 = int_to_ptr.vmem [resolvable:$true] %s33
      %39 = dma.hbm_to_vmem [thread:$0]  %s1, 256, %s34, [#allocation9], 128, 128, 8
    $region9: #{tpu_custom_call.1} parent=1 // pred_fallthru
      _
    // Predicated region
    $region10: #{tpu_custom_call.1} parent=1 // pred_check
      _
    $region11: #{tpu_custom_call.1} parent=1 // pred_check_branch
      %41 = sbr.rel (0) target = $region13
    $region12: #{tpu_custom_call.1} parent=1 // pred_region
      %s43 = ssub.s32 512, 512
      %44 = vsyncadd [#allocation9], %s43
      %s45 = sshll.u32 [#allocation10], 4
      %s46 = int_to_ptr.vmem [resolvable:$true] %s45
      %51 = dma.hbm_to_vmem [thread:$0]  %s2, 512, %s46, [#allocation9], 128, 128, 8
    $region13: #{tpu_custom_call.1} parent=1 // pred_fallthru
      _
    // Predicated region
    $region14: #{tpu_custom_call.1} parent=1 // pred_check
      _
    $region15: #{tpu_custom_call.1} parent=1 // pred_check_branch
      %53 = sbr.rel (0) target = $region17
    $region16: #{tpu_custom_call.1} parent=1 // pred_region
      _
    $region17: #{tpu_custom_call.1} parent=1 // pred_fallthru
      _
    // Predicated region
    $region18: #{tpu_custom_call.1} parent=1 // pred_check
      _
    $region19: #{tpu_custom_call.1} parent=1 // pred_check_branch
      %55 = sbr.rel (0) target = $region21
    $region20: #{tpu_custom_call.1} parent=1 // pred_region
      %56 = dma.done [#allocation6], 1024
    $region21: #{tpu_custom_call.1} parent=1 // pred_fallthru
      _
    // Predicated region
    $region22: #{tpu_custom_call.1} parent=1 // pred_check
      _
    $region23: #{tpu_custom_call.1} parent=1 // pred_check_branch
      %58 = sbr.rel (0) target = $region25
    $region24: #{tpu_custom_call.1} parent=1 // pred_region
      %59 = dma.done [#allocation9], 256
    $region25: #{tpu_custom_call.1} parent=1 // pred_fallthru
      _
    // Predicated region
    $region26: #{tpu_custom_call.1} parent=1 // pred_check
      _
    $region27: #{tpu_custom_call.1} parent=1 // pred_check_branch
      %61 = sbr.rel (0) target = $region29
    $region28: #{tpu_custom_call.1} parent=1 // pred_region
      %62 = dma.done [#allocation9], 512
    $region29: #{tpu_custom_call.1} parent=1 // pred_fallthru
      _
    %p63 = scmp.eq.s32.totalorder 0, 0
    // Predicated region
    $region30: #{tpu_custom_call.1} parent=1 // pred_check
      %p64 = pneg %p63
    $region31: #{tpu_custom_call.1} parent=1 // pred_check_branch
      %66 = sbr.rel (%p64) target = $region33
    $region32: #{tpu_custom_call.1} parent=1 // pred_region
      %vm67 = vcmask 261120
      %68 = vst.msk [vmem:[#allocation3] sm:$0xff] %vm67, 0.0
      %69 = vst.msk [vmem:[#allocation4] sm:$0xff] %vm67, 0.0
    $region33: #{tpu_custom_call.1} parent=1 // pred_fallthru
      _
    %v70 = vld [vmem:[#allocation8] sm:$0xff]
    %v71 = vld [vmem:[#allocation8 + $0x8] sm:$0xff]
    %v72 = vld [vmem:[#allocation10] sm:$0xff]
    %v73 = vld [vmem:[#allocation10 + $0x8] sm:$0xff]
    %v74 = vld [vmem:[#allocation10 + $0x10] sm:$0xff]
    %v75 = vld [vmem:[#allocation10 + $0x18] sm:$0xff]
    %v76 = vld [vmem:[%s3] sm:$0x1]
    %v77 = vld [vmem:[#allocation5] sm:$0xff]
    %v79 = vlaneseq
    %v80 = vshrl.u32 %v79, 7
    %v81 = vsub.s32 0, %v80
    %v82 = vrot.slane %v76, %v81
    %vm84 = vcmask 130048
    %v86 = vsel %vm84, %v77, 0
    %88 = vmatprep.subr.mxu0 0.0
    %89 = vmatpush1.msra.mxu0 %v70
    %90 = vmatprep.subr.mxu0 0.0
    %91 = vmatpush1.msra.mxu0 %v71
    %92 = vmatprep.subr.mxu0 0.0
    %93 = vmatpush1.msra.mxu0 0.0
    %94 = vmatprep.subr.mxu0 0.0
    %95 = vmatpush1.msra.mxu0 0.0
    %96 = vmatprep.subr.mxu0 0.0
    %97 = vmatpush1.msra.mxu0 0.0
    %98 = vmatprep.subr.mxu0 0.0
    %99 = vmatpush1.msra.mxu0 0.0
    %100 = vmatprep.subr.mxu0 0.0
    %101 = vmatpush1.msra.mxu0 0.0
    %102 = vmatprep.subr.mxu0 0.0
    %103 = vmatpush1.msra.mxu0 0.0
    %104 = vmatprep.subr.mxu0 0.0
    %105 = vmatpush1.msra.mxu0 0.0
    %106 = vmatprep.subr.mxu0 0.0
    %107 = vmatpush1.msra.mxu0 0.0
    %108 = vmatprep.subr.mxu0 0.0
    %109 = vmatpush1.msra.mxu0 0.0
    %110 = vmatprep.subr.mxu0 0.0
    %111 = vmatpush1.msra.mxu0 0.0
    %112 = vmatprep.subr.mxu0 0.0
    %113 = vmatpush1.msra.mxu0 0.0
    %114 = vmatprep.subr.mxu0 0.0
    %115 = vmatpush1.msra.mxu0 0.0
    %116 = vmatprep.subr.mxu0 0.0
    %117 = vmatpush1.msra.mxu0 0.0
    %118 = vmatprep.subr.mxu0 0.0
    %119 = vmatpush1.msra.mxu0 0.0
    %120 = vmatprep.subr.mxu0 0.0
    %121 = vmatpush1.msra.mxu0 0.0
    %122 = vmatprep.subr.mxu0 0.0
    %123 = vmatpush1.msra.mxu0 0.0
    %124 = vmatprep.subr.mxu0 0.0
    %125 = vmatpush1.msra.mxu0 0.0
    %126 = vmatprep.subr.mxu0 0.0
    %127 = vmatpush1.msra.mxu0 0.0
    %128 = vmatprep.subr.mxu0 0.0
    %129 = vmatpush1.msra.mxu0 0.0
    %130 = vmatprep.subr.mxu0 0.0
    %131 = vmatpush1.msra.mxu0 0.0
    %132 = vmatprep.subr.mxu0 0.0
    %133 = vmatpush1.msra.mxu0 0.0
    %134 = vmatprep.subr.mxu0 0.0
    %135 = vmatpush1.msra.mxu0 0.0
    %136 = vmatprep.subr.mxu0 0.0
    %137 = vmatpush1.msra.mxu0 0.0
    %138 = vmatprep.subr.mxu0 0.0
    %139 = vmatpush1.msra.mxu0 0.0
    %140 = vmatprep.subr.mxu0 0.0
    %141 = vmatpush1.msra.mxu0 0.0
    %142 = vmatprep.subr.mxu0 0.0
    %143 = vmatpush1.msra.mxu0 0.0
    %144 = vmatprep.subr.mxu0 0.0
    %145 = vmatpush1.msra.mxu0 0.0
    %146 = vmatprep.subr.mxu0 0.0
    %147 = vmatpush1.msra.mxu0 0.0
    %148 = vmatprep.subr.mxu0 0.0
    %149 = vmatpush1.msra.mxu0 0.0
    %150 = vmatprep.subr.mxu0 0.0
    %151 = vmatpush1.msra.mxu0 0.0
    %152 = vmatprep.mubr.f32.mxu0 0.0
    %153 = vmatmul.mubr.f32.gmra.mrb[0].mxu0 %v86
    %v154 = vpop.f32.mrb[0].mxu0
    %v155 = vadd.f32 %v82, %v154
    %v156 = vpop.f32.mrb[0].mxu0
    %157 = vdwg.mxu0
    %158 = vst [vmem:[#allocation2] sm:$0xff] %v155
    %s159 = scalar_lea.vmem [#allocation5], 8
    %v160 = vld [vmem:[%s159] sm:$0xff]
    %v162 = vsel %vm84, %v160, 0
    %164 = vmatprep.subr.mxu0 0.0
    %165 = vmatpush1.msra.mxu0 %v70
    %166 = vmatprep.subr.mxu0 0.0
    %167 = vmatpush1.msra.mxu0 %v71
    %168 = vmatprep.subr.mxu0 0.0
    %169 = vmatpush1.msra.mxu0 0.0
    %170 = vmatprep.subr.mxu0 0.0
    %171 = vmatpush1.msra.mxu0 0.0
    %172 = vmatprep.subr.mxu0 0.0
    %173 = vmatpush1.msra.mxu0 0.0
    %174 = vmatprep.subr.mxu0 0.0
    %175 = vmatpush1.msra.mxu0 0.0
    %176 = vmatprep.subr.mxu0 0.0
    %177 = vmatpush1.msra.mxu0 0.0
    %178 = vmatprep.subr.mxu0 0.0
    %179 = vmatpush1.msra.mxu0 0.0
    %180 = vmatprep.subr.mxu0 0.0
    %181 = vmatpush1.msra.mxu0 0.0
    %182 = vmatprep.subr.mxu0 0.0
    %183 = vmatpush1.msra.mxu0 0.0
    %184 = vmatprep.subr.mxu0 0.0
    %185 = vmatpush1.msra.mxu0 0.0
    %186 = vmatprep.subr.mxu0 0.0
    %187 = vmatpush1.msra.mxu0 0.0
    %188 = vmatprep.subr.mxu0 0.0
    %189 = vmatpush1.msra.mxu0 0.0
    %190 = vmatprep.subr.mxu0 0.0
    %191 = vmatpush1.msra.mxu0 0.0
    %192 = vmatprep.subr.mxu0 0.0
    %193 = vmatpush1.msra.mxu0 0.0
    %194 = vmatprep.subr.mxu0 0.0
    %195 = vmatpush1.msra.mxu0 0.0
    %196 = vmatprep.subr.mxu0 0.0
    %197 = vmatpush1.msra.mxu0 0.0
    %198 = vmatprep.subr.mxu0 0.0
    %199 = vmatpush1.msra.mxu0 0.0
    %200 = vmatprep.subr.mxu0 0.0
    %201 = vmatpush1.msra.mxu0 0.0
    %202 = vmatprep.subr.mxu0 0.0
    %203 = vmatpush1.msra.mxu0 0.0
    %204 = vmatprep.subr.mxu0 0.0
    %205 = vmatpush1.msra.mxu0 0.0
    %206 = vmatprep.subr.mxu0 0.0
    %207 = vmatpush1.msra.mxu0 0.0
    %208 = vmatprep.subr.mxu0 0.0
    %209 = vmatpush1.msra.mxu0 0.0
    %210 = vmatprep.subr.mxu0 0.0
    %211 = vmatpush1.msra.mxu0 0.0
    %212 = vmatprep.subr.mxu0 0.0
    %213 = vmatpush1.msra.mxu0 0.0
    %214 = vmatprep.subr.mxu0 0.0
    %215 = vmatpush1.msra.mxu0 0.0
    %216 = vmatprep.subr.mxu0 0.0
    %217 = vmatpush1.msra.mxu0 0.0
    %218 = vmatprep.subr.mxu0 0.0
    %219 = vmatpush1.msra.mxu0 0.0
    %220 = vmatprep.subr.mxu0 0.0
    %221 = vmatpush1.msra.mxu0 0.0
    %222 = vmatprep.subr.mxu0 0.0
    %223 = vmatpush1.msra.mxu0 0.0
    %224 = vmatprep.subr.mxu0 0.0
    %225 = vmatpush1.msra.mxu0 0.0
    %226 = vmatprep.subr.mxu0 0.0
    %227 = vmatpush1.msra.mxu0 0.0
    %228 = vmatprep.mubr.f32.mxu0 0.0
    %229 = vmatmul.mubr.f32.gmra.mrb[0].mxu0 %v162
    %v230 = vpop.f32.mrb[0].mxu0
    %v231 = vadd.f32 %v82, %v230
    %v232 = vpop.f32.mrb[0].mxu0
    %233 = vdwg.mxu0
    %s234 = scalar_lea.vmem [#allocation2], 8
    %235 = vst [vmem:[%s234] sm:$0xff] %v231
    %s236 = scalar_lea.vmem [#allocation5], 16
    %v237 = vld [vmem:[%s236] sm:$0xff]
    %v239 = vsel %vm84, %v237, 0
    %241 = vmatprep.subr.mxu0 0.0
    %242 = vmatpush1.msra.mxu0 %v70
    %243 = vmatprep.subr.mxu0 0.0
    %244 = vmatpush1.msra.mxu0 %v71
    %245 = vmatprep.subr.mxu0 0.0
    %246 = vmatpush1.msra.mxu0 0.0
    %247 = vmatprep.subr.mxu0 0.0
    %248 = vmatpush1.msra.mxu0 0.0
    %249 = vmatprep.subr.mxu0 0.0
    %250 = vmatpush1.msra.mxu0 0.0
    %251 = vmatprep.subr.mxu0 0.0
    %252 = vmatpush1.msra.mxu0 0.0
    %253 = vmatprep.subr.mxu0 0.0
    %254 = vmatpush1.msra.mxu0 0.0
    %255 = vmatprep.subr.mxu0 0.0
    %256 = vmatpush1.msra.mxu0 0.0
    %257 = vmatprep.subr.mxu0 0.0
    %258 = vmatpush1.msra.mxu0 0.0
    %259 = vmatprep.subr.mxu0 0.0
    %260 = vmatpush1.msra.mxu0 0.0
    %261 = vmatprep.subr.mxu0 0.0
    %262 = vmatpush1.msra.mxu0 0.0
    %263 = vmatprep.subr.mxu0 0.0
    %264 = vmatpush1.msra.mxu0 0.0
    %265 = vmatprep.subr.mxu0 0.0
    %266 = vmatpush1.msra.mxu0 0.0
    %267 = vmatprep.subr.mxu0 0.0
    %268 = vmatpush1.msra.mxu0 0.0
    %269 = vmatprep.subr.mxu0 0.0
    %270 = vmatpush1.msra.mxu0 0.0
    %271 = vmatprep.subr.mxu0 0.0
    %272 = vmatpush1.msra.mxu0 0.0
    %273 = vmatprep.subr.mxu0 0.0
    %274 = vmatpush1.msra.mxu0 0.0
    %275 = vmatprep.subr.mxu0 0.0
    %276 = vmatpush1.msra.mxu0 0.0
    %277 = vmatprep.subr.mxu0 0.0
    %278 = vmatpush1.msra.mxu0 0.0
    %279 = vmatprep.subr.mxu0 0.0
    %280 = vmatpush1.msra.mxu0 0.0
    %281 = vmatprep.subr.mxu0 0.0
    %282 = vmatpush1.msra.mxu0 0.0
    %283 = vmatprep.subr.mxu0 0.0
    %284 = vmatpush1.msra.mxu0 0.0
    %285 = vmatprep.subr.mxu0 0.0
    %286 = vmatpush1.msra.mxu0 0.0
    %287 = vmatprep.subr.mxu0 0.0
    %288 = vmatpush1.msra.mxu0 0.0
    %289 = vmatprep.subr.mxu0 0.0
    %290 = vmatpush1.msra.mxu0 0.0
    %291 = vmatprep.subr.mxu0 0.0
    %292 = vmatpush1.msra.mxu0 0.0
    %293 = vmatprep.subr.mxu0 0.0
    %294 = vmatpush1.msra.mxu0 0.0
    %295 = vmatprep.subr.mxu0 0.0
    %296 = vmatpush1.msra.mxu0 0.0
    %297 = vmatprep.subr.mxu0 0.0
    %298 = vmatpush1.msra.mxu0 0.0
    %299 = vmatprep.subr.mxu0 0.0
    %300 = vmatpush1.msra.mxu0 0.0
    %301 = vmatprep.subr.mxu0 0.0
    %302 = vmatpush1.msra.mxu0 0.0
    %303 = vmatprep.subr.mxu0 0.0
    %304 = vmatpush1.msra.mxu0 0.0
    %305 = vmatprep.mubr.f32.mxu0 0.0
    %306 = vmatmul.mubr.f32.gmra.mrb[0].mxu0 %v239
    %v307 = vpop.f32.mrb[0].mxu0
    %v308 = vadd.f32 %v82, %v307
    %v309 = vpop.f32.mrb[0].mxu0
    %310 = vdwg.mxu0
    %s311 = scalar_lea.vmem [#allocation2], 16
    %312 = vst [vmem:[%s311] sm:$0xff] %v308
    %s313 = scalar_lea.vmem [#allocation5], 24
    %v314 = vld [vmem:[%s313] sm:$0xff]
    %v316 = vsel %vm84, %v314, 0
    %318 = vmatprep.subr.mxu0 0.0
    %319 = vmatpush1.msra.mxu0 %v70
    %320 = vmatprep.subr.mxu0 0.0
    %321 = vmatpush1.msra.mxu0 %v71
    %322 = vmatprep.subr.mxu0 0.0
    %323 = vmatpush1.msra.mxu0 0.0
    %324 = vmatprep.subr.mxu0 0.0
    %325 = vmatpush1.msra.mxu0 0.0
    %326 = vmatprep.subr.mxu0 0.0
    %327 = vmatpush1.msra.mxu0 0.0
    %328 = vmatprep.subr.mxu0 0.0
    %329 = vmatpush1.msra.mxu0 0.0
    %330 = vmatprep.subr.mxu0 0.0
    %331 = vmatpush1.msra.mxu0 0.0
    %332 = vmatprep.subr.mxu0 0.0
    %333 = vmatpush1.msra.mxu0 0.0
    %334 = vmatprep.subr.mxu0 0.0
    %335 = vmatpush1.msra.mxu0 0.0
    %336 = vmatprep.subr.mxu0 0.0
    %337 = vmatpush1.msra.mxu0 0.0
    %338 = vmatprep.subr.mxu0 0.0
    %339 = vmatpush1.msra.mxu0 0.0
    %340 = vmatprep.subr.mxu0 0.0
    %341 = vmatpush1.msra.mxu0 0.0
    %342 = vmatprep.subr.mxu0 0.0
    %343 = vmatpush1.msra.mxu0 0.0
    %344 = vmatprep.subr.mxu0 0.0
    %345 = vmatpush1.msra.mxu0 0.0
    %346 = vmatprep.subr.mxu0 0.0
    %347 = vmatpush1.msra.mxu0 0.0
    %348 = vmatprep.subr.mxu0 0.0
    %349 = vmatpush1.msra.mxu0 0.0
    %350 = vmatprep.subr.mxu0 0.0
    %351 = vmatpush1.msra.mxu0 0.0
    %352 = vmatprep.subr.mxu0 0.0
    %353 = vmatpush1.msra.mxu0 0.0
    %354 = vmatprep.subr.mxu0 0.0
    %355 = vmatpush1.msra.mxu0 0.0
    %356 = vmatprep.subr.mxu0 0.0
    %357 = vmatpush1.msra.mxu0 0.0
    %358 = vmatprep.subr.mxu0 0.0
    %359 = vmatpush1.msra.mxu0 0.0
    %360 = vmatprep.subr.mxu0 0.0
    %361 = vmatpush1.msra.mxu0 0.0
    %362 = vmatprep.subr.mxu0 0.0
    %363 = vmatpush1.msra.mxu0 0.0
    %364 = vmatprep.subr.mxu0 0.0
    %365 = vmatpush1.msra.mxu0 0.0
    %366 = vmatprep.subr.mxu0 0.0
    %367 = vmatpush1.msra.mxu0 0.0
    %368 = vmatprep.subr.mxu0 0.0
    %369 = vmatpush1.msra.mxu0 0.0
    %370 = vmatprep.subr.mxu0 0.0
    %371 = vmatpush1.msra.mxu0 0.0
    %372 = vmatprep.subr.mxu0 0.0
    %373 = vmatpush1.msra.mxu0 0.0
    %374 = vmatprep.subr.mxu0 0.0
    %375 = vmatpush1.msra.mxu0 0.0
    %376 = vmatprep.subr.mxu0 0.0
    %377 = vmatpush1.msra.mxu0 0.0
    %378 = vmatprep.subr.mxu0 0.0
    %379 = vmatpush1.msra.mxu0 0.0
    %380 = vmatprep.subr.mxu0 0.0
    %381 = vmatpush1.msra.mxu0 0.0
    %382 = vmatprep.mubr.f32.mxu0 0.0
    %383 = vmatmul.mubr.f32.gmra.mrb[0].mxu0 %v316
    %v384 = vpop.f32.mrb[0].mxu0
    %v385 = vadd.f32 %v82, %v384
    %v386 = vpop.f32.mrb[0].mxu0
    %387 = vdwg.mxu0
    %s388 = scalar_lea.vmem [#allocation2], 24
    %389 = vst [vmem:[%s388] sm:$0xff] %v385
    %s390 = scalar_lea.vmem [#allocation5], 32
    %v391 = vld [vmem:[%s390] sm:$0xff]
    %v393 = vsel %vm84, %v391, 0
    %395 = vmatprep.subr.mxu0 0.0
    %396 = vmatpush1.msra.mxu0 %v70
    %397 = vmatprep.subr.mxu0 0.0
    %398 = vmatpush1.msra.mxu0 %v71
    %399 = vmatprep.subr.mxu0 0.0
    %400 = vmatpush1.msra.mxu0 0.0
    %401 = vmatprep.subr.mxu0 0.0
    %402 = vmatpush1.msra.mxu0 0.0
    %403 = vmatprep.subr.mxu0 0.0
    %404 = vmatpush1.msra.mxu0 0.0
    %405 = vmatprep.subr.mxu0 0.0
    %406 = vmatpush1.msra.mxu0 0.0
    %407 = vmatprep.subr.mxu0 0.0
    %408 = vmatpush1.msra.mxu0 0.0
    %409 = vmatprep.subr.mxu0 0.0
    %410 = vmatpush1.msra.mxu0 0.0
    %411 = vmatprep.subr.mxu0 0.0
    %412 = vmatpush1.msra.mxu0 0.0
    %413 = vmatprep.subr.mxu0 0.0
    %414 = vmatpush1.msra.mxu0 0.0
    %415 = vmatprep.subr.mxu0 0.0
    %416 = vmatpush1.msra.mxu0 0.0
    %417 = vmatprep.subr.mxu0 0.0
    %418 = vmatpush1.msra.mxu0 0.0
    %419 = vmatprep.subr.mxu0 0.0
    %420 = vmatpush1.msra.mxu0 0.0
    %421 = vmatprep.subr.mxu0 0.0
    %422 = vmatpush1.msra.mxu0 0.0
    %423 = vmatprep.subr.mxu0 0.0
    %424 = vmatpush1.msra.mxu0 0.0
    %425 = vmatprep.subr.mxu0 0.0
    %426 = vmatpush1.msra.mxu0 0.0
    %427 = vmatprep.subr.mxu0 0.0
    %428 = vmatpush1.msra.mxu0 0.0
    %429 = vmatprep.subr.mxu0 0.0
    %430 = vmatpush1.msra.mxu0 0.0
    %431 = vmatprep.subr.mxu0 0.0
    %432 = vmatpush1.msra.mxu0 0.0
    %433 = vmatprep.subr.mxu0 0.0
    %434 = vmatpush1.msra.mxu0 0.0
    %435 = vmatprep.subr.mxu0 0.0
    %436 = vmatpush1.msra.mxu0 0.0
    %437 = vmatprep.subr.mxu0 0.0
    %438 = vmatpush1.msra.mxu0 0.0
    %439 = vmatprep.subr.mxu0 0.0
    %440 = vmatpush1.msra.mxu0 0.0
    %441 = vmatprep.subr.mxu0 0.0
    %442 = vmatpush1.msra.mxu0 0.0
    %443 = vmatprep.subr.mxu0 0.0
    %444 = vmatpush1.msra.mxu0 0.0
    %445 = vmatprep.subr.mxu0 0.0
    %446 = vmatpush1.msra.mxu0 0.0
    %447 = vmatprep.subr.mxu0 0.0
    %448 = vmatpush1.msra.mxu0 0.0
    %449 = vmatprep.subr.mxu0 0.0
    %450 = vmatpush1.msra.mxu0 0.0
    %451 = vmatprep.subr.mxu0 0.0
    %452 = vmatpush1.msra.mxu0 0.0
    %453 = vmatprep.subr.mxu0 0.0
    %454 = vmatpush1.msra.mxu0 0.0
    %455 = vmatprep.subr.mxu0 0.0
    %456 = vmatpush1.msra.mxu0 0.0
    %457 = vmatprep.subr.mxu0 0.0
    %458 = vmatpush1.msra.mxu0 0.0
    %459 = vmatprep.mubr.f32.mxu0 0.0
    %460 = vmatmul.mubr.f32.gmra.mrb[0].mxu0 %v393
    %v461 = vpop.f32.mrb[0].mxu0
    %v462 = vadd.f32 %v82, %v461
    %v463 = vpop.f32.mrb[0].mxu0
    %464 = vdwg.mxu0
    %s465 = scalar_lea.vmem [#allocation2], 32
    %466 = vst [vmem:[%s465] sm:$0xff] %v462
    %s467 = scalar_lea.vmem [#allocation5], 40
    %v468 = vld [vmem:[%s467] sm:$0xff]
    %v470 = vsel %vm84, %v468, 0
    %472 = vmatprep.subr.mxu0 0.0
    %473 = vmatpush1.msra.mxu0 %v70
    %474 = vmatprep.subr.mxu0 0.0
    %475 = vmatpush1.msra.mxu0 %v71
    %476 = vmatprep.subr.mxu0 0.0
    %477 = vmatpush1.msra.mxu0 0.0
    %478 = vmatprep.subr.mxu0 0.0
    %479 = vmatpush1.msra.mxu0 0.0
    %480 = vmatprep.subr.mxu0 0.0
    %481 = vmatpush1.msra.mxu0 0.0
    %482 = vmatprep.subr.mxu0 0.0
    %483 = vmatpush1.msra.mxu0 0.0
    %484 = vmatprep.subr.mxu0 0.0
    %485 = vmatpush1.msra.mxu0 0.0
    %486 = vmatprep.subr.mxu0 0.0
    %487 = vmatpush1.msra.mxu0 0.0
    %488 = vmatprep.subr.mxu0 0.0
    %489 = vmatpush1.msra.mxu0 0.0
    %490 = vmatprep.subr.mxu0 0.0
    %491 = vmatpush1.msra.mxu0 0.0
    %492 = vmatprep.subr.mxu0 0.0
    %493 = vmatpush1.msra.mxu0 0.0
    %494 = vmatprep.subr.mxu0 0.0
    %495 = vmatpush1.msra.mxu0 0.0
    %496 = vmatprep.subr.mxu0 0.0
    %497 = vmatpush1.msra.mxu0 0.0
    %498 = vmatprep.subr.mxu0 0.0
    %499 = vmatpush1.msra.mxu0 0.0
    %500 = vmatprep.subr.mxu0 0.0
    %501 = vmatpush1.msra.mxu0 0.0
    %502 = vmatprep.subr.mxu0 0.0
    %503 = vmatpush1.msra.mxu0 0.0
    %504 = vmatprep.subr.mxu0 0.0
    %505 = vmatpush1.msra.mxu0 0.0
    %506 = vmatprep.subr.mxu0 0.0
    %507 = vmatpush1.msra.mxu0 0.0
    %508 = vmatprep.subr.mxu0 0.0
    %509 = vmatpush1.msra.mxu0 0.0
    %510 = vmatprep.subr.mxu0 0.0
    %511 = vmatpush1.msra.mxu0 0.0
    %512 = vmatprep.subr.mxu0 0.0
    %513 = vmatpush1.msra.mxu0 0.0
    %514 = vmatprep.subr.mxu0 0.0
    %515 = vmatpush1.msra.mxu0 0.0
    %516 = vmatprep.subr.mxu0 0.0
    %517 = vmatpush1.msra.mxu0 0.0
    %518 = vmatprep.subr.mxu0 0.0
    %519 = vmatpush1.msra.mxu0 0.0
    %520 = vmatprep.subr.mxu0 0.0
    %521 = vmatpush1.msra.mxu0 0.0
    %522 = vmatprep.subr.mxu0 0.0
    %523 = vmatpush1.msra.mxu0 0.0
    %524 = vmatprep.subr.mxu0 0.0
    %525 = vmatpush1.msra.mxu0 0.0
    %526 = vmatprep.subr.mxu0 0.0
    %527 = vmatpush1.msra.mxu0 0.0
    %528 = vmatprep.subr.mxu0 0.0
    %529 = vmatpush1.msra.mxu0 0.0
    %530 = vmatprep.subr.mxu0 0.0
    %531 = vmatpush1.msra.mxu0 0.0
    %532 = vmatprep.subr.mxu0 0.0
    %533 = vmatpush1.msra.mxu0 0.0
    %534 = vmatprep.subr.mxu0 0.0
    %535 = vmatpush1.msra.mxu0 0.0
    %536 = vmatprep.mubr.f32.mxu0 0.0
    %537 = vmatmul.mubr.f32.gmra.mrb[0].mxu0 %v470
    %v538 = vpop.f32.mrb[0].mxu0
    %v539 = vadd.f32 %v82, %v538
    %v540 = vpop.f32.mrb[0].mxu0
    %541 = vdwg.mxu0
    %s542 = scalar_lea.vmem [#allocation2], 40
    %543 = vst [vmem:[%s542] sm:$0xff] %v539
    %s544 = scalar_lea.vmem [#allocation5], 48
    %v545 = vld [vmem:[%s544] sm:$0xff]
    %v547 = vsel %vm84, %v545, 0
    %549 = vmatprep.subr.mxu0 0.0
    %550 = vmatpush1.msra.mxu0 %v70
    %551 = vmatprep.subr.mxu0 0.0
    %552 = vmatpush1.msra.mxu0 %v71
    %553 = vmatprep.subr.mxu0 0.0
    %554 = vmatpush1.msra.mxu0 0.0
    %555 = vmatprep.subr.mxu0 0.0
    %556 = vmatpush1.msra.mxu0 0.0
    %557 = vmatprep.subr.mxu0 0.0
    %558 = vmatpush1.msra.mxu0 0.0
    %559 = vmatprep.subr.mxu0 0.0
    %560 = vmatpush1.msra.mxu0 0.0
    %561 = vmatprep.subr.mxu0 0.0
    %562 = vmatpush1.msra.mxu0 0.0
    %563 = vmatprep.subr.mxu0 0.0
    %564 = vmatpush1.msra.mxu0 0.0
    %565 = vmatprep.subr.mxu0 0.0
    %566 = vmatpush1.msra.mxu0 0.0
    %567 = vmatprep.subr.mxu0 0.0
    %568 = vmatpush1.msra.mxu0 0.0
    %569 = vmatprep.subr.mxu0 0.0
    %570 = vmatpush1.msra.mxu0 0.0
    %571 = vmatprep.subr.mxu0 0.0
    %572 = vmatpush1.msra.mxu0 0.0
    %573 = vmatprep.subr.mxu0 0.0
    %574 = vmatpush1.msra.mxu0 0.0
    %575 = vmatprep.subr.mxu0 0.0
    %576 = vmatpush1.msra.mxu0 0.0
    %577 = vmatprep.subr.mxu0 0.0
    %578 = vmatpush1.msra.mxu0 0.0
    %579 = vmatprep.subr.mxu0 0.0
    %580 = vmatpush1.msra.mxu0 0.0
    %581 = vmatprep.subr.mxu0 0.0
    %582 = vmatpush1.msra.mxu0 0.0
    %583 = vmatprep.subr.mxu0 0.0
    %584 = vmatpush1.msra.mxu0 0.0
    %585 = vmatprep.subr.mxu0 0.0
    %586 = vmatpush1.msra.mxu0 0.0
    %587 = vmatprep.subr.mxu0 0.0
    %588 = vmatpush1.msra.mxu0 0.0
    %589 = vmatprep.subr.mxu0 0.0
    %590 = vmatpush1.msra.mxu0 0.0
    %591 = vmatprep.subr.mxu0 0.0
    %592 = vmatpush1.msra.mxu0 0.0
    %593 = vmatprep.subr.mxu0 0.0
    %594 = vmatpush1.msra.mxu0 0.0
    %595 = vmatprep.subr.mxu0 0.0
    %596 = vmatpush1.msra.mxu0 0.0
    %597 = vmatprep.subr.mxu0 0.0
    %598 = vmatpush1.msra.mxu0 0.0
    %599 = vmatprep.subr.mxu0 0.0
    %600 = vmatpush1.msra.mxu0 0.0
    %601 = vmatprep.subr.mxu0 0.0
    %602 = vmatpush1.msra.mxu0 0.0
    %603 = vmatprep.subr.mxu0 0.0
    %604 = vmatpush1.msra.mxu0 0.0
    %605 = vmatprep.subr.mxu0 0.0
    %606 = vmatpush1.msra.mxu0 0.0
    %607 = vmatprep.subr.mxu0 0.0
    %608 = vmatpush1.msra.mxu0 0.0
    %609 = vmatprep.subr.mxu0 0.0
    %610 = vmatpush1.msra.mxu0 0.0
    %611 = vmatprep.subr.mxu0 0.0
    %612 = vmatpush1.msra.mxu0 0.0
    %613 = vmatprep.mubr.f32.mxu0 0.0
    %614 = vmatmul.mubr.f32.gmra.mrb[0].mxu0 %v547
    %v615 = vpop.f32.mrb[0].mxu0
    %v616 = vadd.f32 %v82, %v615
    %v617 = vpop.f32.mrb[0].mxu0
    %618 = vdwg.mxu0
    %s619 = scalar_lea.vmem [#allocation2], 48
    %620 = vst [vmem:[%s619] sm:$0xff] %v616
    %s621 = scalar_lea.vmem [#allocation5], 56
    %v622 = vld [vmem:[%s621] sm:$0xff]
    %v624 = vsel %vm84, %v622, 0
    %626 = vmatprep.subr.mxu0 0.0
    %627 = vmatpush1.msra.mxu0 %v70
    %628 = vmatprep.subr.mxu0 0.0
    %629 = vmatpush1.msra.mxu0 %v71
    %630 = vmatprep.subr.mxu0 0.0
    %631 = vmatpush1.msra.mxu0 0.0
    %632 = vmatprep.subr.mxu0 0.0
    %633 = vmatpush1.msra.mxu0 0.0
    %634 = vmatprep.subr.mxu0 0.0
    %635 = vmatpush1.msra.mxu0 0.0
    %636 = vmatprep.subr.mxu0 0.0
    %637 = vmatpush1.msra.mxu0 0.0
    %638 = vmatprep.subr.mxu0 0.0
    %639 = vmatpush1.msra.mxu0 0.0
    %640 = vmatprep.subr.mxu0 0.0
    %641 = vmatpush1.msra.mxu0 0.0
    %642 = vmatprep.subr.mxu0 0.0
    %643 = vmatpush1.msra.mxu0 0.0
    %644 = vmatprep.subr.mxu0 0.0
    %645 = vmatpush1.msra.mxu0 0.0
    %646 = vmatprep.subr.mxu0 0.0
    %647 = vmatpush1.msra.mxu0 0.0
    %648 = vmatprep.subr.mxu0 0.0
    %649 = vmatpush1.msra.mxu0 0.0
    %650 = vmatprep.subr.mxu0 0.0
    %651 = vmatpush1.msra.mxu0 0.0
    %652 = vmatprep.subr.mxu0 0.0
    %653 = vmatpush1.msra.mxu0 0.0
    %654 = vmatprep.subr.mxu0 0.0
    %655 = vmatpush1.msra.mxu0 0.0
    %656 = vmatprep.subr.mxu0 0.0
    %657 = vmatpush1.msra.mxu0 0.0
    %658 = vmatprep.subr.mxu0 0.0
    %659 = vmatpush1.msra.mxu0 0.0
    %660 = vmatprep.subr.mxu0 0.0
    %661 = vmatpush1.msra.mxu0 0.0
    %662 = vmatprep.subr.mxu0 0.0
    %663 = vmatpush1.msra.mxu0 0.0
    %664 = vmatprep.subr.mxu0 0.0
    %665 = vmatpush1.msra.mxu0 0.0
    %666 = vmatprep.subr.mxu0 0.0
    %667 = vmatpush1.msra.mxu0 0.0
    %668 = vmatprep.subr.mxu0 0.0
    %669 = vmatpush1.msra.mxu0 0.0
    %670 = vmatprep.subr.mxu0 0.0
    %671 = vmatpush1.msra.mxu0 0.0
    %672 = vmatprep.subr.mxu0 0.0
    %673 = vmatpush1.msra.mxu0 0.0
    %674 = vmatprep.subr.mxu0 0.0
    %675 = vmatpush1.msra.mxu0 0.0
    %676 = vmatprep.subr.mxu0 0.0
    %677 = vmatpush1.msra.mxu0 0.0
    %678 = vmatprep.subr.mxu0 0.0
    %679 = vmatpush1.msra.mxu0 0.0
    %680 = vmatprep.subr.mxu0 0.0
    %681 = vmatpush1.msra.mxu0 0.0
    %682 = vmatprep.subr.mxu0 0.0
    %683 = vmatpush1.msra.mxu0 0.0
    %684 = vmatprep.subr.mxu0 0.0
    %685 = vmatpush1.msra.mxu0 0.0
    %686 = vmatprep.subr.mxu0 0.0
    %687 = vmatpush1.msra.mxu0 0.0
    %688 = vmatprep.subr.mxu0 0.0
    %689 = vmatpush1.msra.mxu0 0.0
    %690 = vmatprep.mubr.f32.mxu0 0.0
    %691 = vmatmul.mubr.f32.gmra.mrb[0].mxu0 %v624
    %v692 = vpop.f32.mrb[0].mxu0
    %v693 = vadd.f32 %v82, %v692
    %v694 = vpop.f32.mrb[0].mxu0
    %695 = vdwg.mxu0
    %s696 = scalar_lea.vmem [#allocation2], 56
    %697 = vst [vmem:[%s696] sm:$0xff] %v693
    %v698 = vld [vmem:[#allocation3] sm:$0xff]
    %v699 = vld [vmem:[#allocation4] sm:$0xff]
    %v700 = vld [vmem:[#allocation2] sm:$0xff]
    %vm701 = vcmask 261120
    %v703 = vsel %vm701, %v698, 0
    %705 = vmatprep.subr.mxu0 0.0
    %706 = vmatpush1.msra.mxu0 %v72
    %707 = vmatprep.subr.mxu0 0.0
    %708 = vmatpush1.msra.mxu0 %v73
    %709 = vmatprep.subr.mxu0 0.0
    %710 = vmatpush1.msra.mxu0 %v74
    %711 = vmatprep.subr.mxu0 0.0
    %712 = vmatpush1.msra.mxu0 %v75
    %713 = vmatprep.subr.mxu0 0.0
    %714 = vmatpush1.msra.mxu0 0.0
    %715 = vmatprep.subr.mxu0 0.0
    %716 = vmatpush1.msra.mxu0 0.0
    %717 = vmatprep.subr.mxu0 0.0
    %718 = vmatpush1.msra.mxu0 0.0
    %719 = vmatprep.subr.mxu0 0.0
    %720 = vmatpush1.msra.mxu0 0.0
    %721 = vmatprep.subr.mxu0 0.0
    %722 = vmatpush1.msra.mxu0 0.0
    %723 = vmatprep.subr.mxu0 0.0
    %724 = vmatpush1.msra.mxu0 0.0
    %725 = vmatprep.subr.mxu0 0.0
    %726 = vmatpush1.msra.mxu0 0.0
    %727 = vmatprep.subr.mxu0 0.0
    %728 = vmatpush1.msra.mxu0 0.0
    %729 = vmatprep.subr.mxu0 0.0
    %730 = vmatpush1.msra.mxu0 0.0
    %731 = vmatprep.subr.mxu0 0.0
    %732 = vmatpush1.msra.mxu0 0.0
    %733 = vmatprep.subr.mxu0 0.0
    %734 = vmatpush1.msra.mxu0 0.0
    %735 = vmatprep.subr.mxu0 0.0
    %736 = vmatpush1.msra.mxu0 0.0
    %737 = vmatprep.subr.mxu0 0.0
    %738 = vmatpush1.msra.mxu0 0.0
    %739 = vmatprep.subr.mxu0 0.0
    %740 = vmatpush1.msra.mxu0 0.0
    %741 = vmatprep.subr.mxu0 0.0
    %742 = vmatpush1.msra.mxu0 0.0
    %743 = vmatprep.subr.mxu0 0.0
    %744 = vmatpush1.msra.mxu0 0.0
    %745 = vmatprep.subr.mxu0 0.0
    %746 = vmatpush1.msra.mxu0 0.0
    %747 = vmatprep.subr.mxu0 0.0
    %748 = vmatpush1.msra.mxu0 0.0
    %749 = vmatprep.subr.mxu0 0.0
    %750 = vmatpush1.msra.mxu0 0.0
    %751 = vmatprep.subr.mxu0 0.0
    %752 = vmatpush1.msra.mxu0 0.0
    %753 = vmatprep.subr.mxu0 0.0
    %754 = vmatpush1.msra.mxu0 0.0
    %755 = vmatprep.subr.mxu0 0.0
    %756 = vmatpush1.msra.mxu0 0.0
    %757 = vmatprep.subr.mxu0 0.0
    %758 = vmatpush1.msra.mxu0 0.0
    %759 = vmatprep.subr.mxu0 0.0
    %760 = vmatpush1.msra.mxu0 0.0
    %761 = vmatprep.subr.mxu0 0.0
    %762 = vmatpush1.msra.mxu0 0.0
    %763 = vmatprep.subr.mxu0 0.0
    %764 = vmatpush1.msra.mxu0 0.0
    %765 = vmatprep.subr.mxu0 0.0
    %766 = vmatpush1.msra.mxu0 0.0
    %767 = vmatprep.subr.mxu0 0.0
    %768 = vmatpush1.msra.mxu0 0.0
    %769 = vmatprep.mubr.f32.mxu0 0.0
    %770 = vmatmul.mubr.f32.gmra.mrb[0].mxu0 %v703
    %v771 = vpop.f32.mrb[0].mxu0
    %v772 = vadd.f32 0.0, %v771
    %v773 = vpop.f32.mrb[0].mxu0
    %774 = vdwg.mxu0
    %v775 = vadd.f32 %v700, %v772
    %v776 = vxor.u32 %v775, 2147483648
    %v777 = vmul.f32 %v776, 1.442695
    %v778 = vpow.pop %v777
    %v779 = vadd.f32 %v778, 1.0
    %v780 = vrcp.pop %v779
    %v781 = vmul.f32 1.0, %v780
    %v782 = vtanh.pop %v775
    %784 = vrot.lane.b32.xlu0 %v699, 32
    %v785 = vpop.permute.xlu0 %784
    %v787 = vmul.f32 %v781, %v785
    %789 = vrot.lane.b32.xlu0 %v782, 32
    %v790 = vpop.permute.xlu0 %789
    %v792 = vmul.f32 %v781, %v790
    %794 = vrot.lane.b32.xlu0 %v792, 32
    %v795 = vpop.permute.xlu0 %794
    %v797 = vadd.f32 %v787, %v795
    %v798 = vtanh.pop %v797
    %800 = vrot.lane.b32.xlu0 %v798, 32
    %v801 = vpop.permute.xlu0 %800
    %v803 = vmul.f32 %v781, %v801
    %805 = vrot.lane.b32.xlu0 %v803, 64
    %v806 = vpop.permute.xlu0 %805
    %808 = vst.msk [vmem:[#allocation11] sm:$0xff] %vm701, %v806
    %v809 = vld [vmem:[%s234] sm:$0xff]
    %v810 = vsel %vm701, %v806, 0
    %812 = vmatprep.subr.mxu0 0.0
    %813 = vmatpush1.msra.mxu0 %v72
    %814 = vmatprep.subr.mxu0 0.0
    %815 = vmatpush1.msra.mxu0 %v73
    %816 = vmatprep.subr.mxu0 0.0
    %817 = vmatpush1.msra.mxu0 %v74
    %818 = vmatprep.subr.mxu0 0.0
    %819 = vmatpush1.msra.mxu0 %v75
    %820 = vmatprep.subr.mxu0 0.0
    %821 = vmatpush1.msra.mxu0 0.0
    %822 = vmatprep.subr.mxu0 0.0
    %823 = vmatpush1.msra.mxu0 0.0
    %824 = vmatprep.subr.mxu0 0.0
    %825 = vmatpush1.msra.mxu0 0.0
    %826 = vmatprep.subr.mxu0 0.0
    %827 = vmatpush1.msra.mxu0 0.0
    %828 = vmatprep.subr.mxu0 0.0
    %829 = vmatpush1.msra.mxu0 0.0
    %830 = vmatprep.subr.mxu0 0.0
    %831 = vmatpush1.msra.mxu0 0.0
    %832 = vmatprep.subr.mxu0 0.0
    %833 = vmatpush1.msra.mxu0 0.0
    %834 = vmatprep.subr.mxu0 0.0
    %835 = vmatpush1.msra.mxu0 0.0
    %836 = vmatprep.subr.mxu0 0.0
    %837 = vmatpush1.msra.mxu0 0.0
    %838 = vmatprep.subr.mxu0 0.0
    %839 = vmatpush1.msra.mxu0 0.0
    %840 = vmatprep.subr.mxu0 0.0
    %841 = vmatpush1.msra.mxu0 0.0
    %842 = vmatprep.subr.mxu0 0.0
    %843 = vmatpush1.msra.mxu0 0.0
    %844 = vmatprep.subr.mxu0 0.0
    %845 = vmatpush1.msra.mxu0 0.0
    %846 = vmatprep.subr.mxu0 0.0
    %847 = vmatpush1.msra.mxu0 0.0
    %848 = vmatprep.subr.mxu0 0.0
    %849 = vmatpush1.msra.mxu0 0.0
    %850 = vmatprep.subr.mxu0 0.0
    %851 = vmatpush1.msra.mxu0 0.0
    %852 = vmatprep.subr.mxu0 0.0
    %853 = vmatpush1.msra.mxu0 0.0
    %854 = vmatprep.subr.mxu0 0.0
    %855 = vmatpush1.msra.mxu0 0.0
    %856 = vmatprep.subr.mxu0 0.0
    %857 = vmatpush1.msra.mxu0 0.0
    %858 = vmatprep.subr.mxu0 0.0
    %859 = vmatpush1.msra.mxu0 0.0
    %860 = vmatprep.subr.mxu0 0.0
    %861 = vmatpush1.msra.mxu0 0.0
    %862 = vmatprep.subr.mxu0 0.0
    %863 = vmatpush1.msra.mxu0 0.0
    %864 = vmatprep.subr.mxu0 0.0
    %865 = vmatpush1.msra.mxu0 0.0
    %866 = vmatprep.subr.mxu0 0.0
    %867 = vmatpush1.msra.mxu0 0.0
    %868 = vmatprep.subr.mxu0 0.0
    %869 = vmatpush1.msra.mxu0 0.0
    %870 = vmatprep.subr.mxu0 0.0
    %871 = vmatpush1.msra.mxu0 0.0
    %872 = vmatprep.subr.mxu0 0.0
    %873 = vmatpush1.msra.mxu0 0.0
    %874 = vmatprep.subr.mxu0 0.0
    %875 = vmatpush1.msra.mxu0 0.0
    %876 = vmatprep.mubr.f32.mxu0 0.0
    %877 = vmatmul.mubr.f32.gmra.mrb[0].mxu0 %v810
    %v878 = vpop.f32.mrb[0].mxu0
    %v879 = vadd.f32 0.0, %v878
    %v880 = vpop.f32.mrb[0].mxu0
    %881 = vdwg.mxu0
    %v882 = vadd.f32 %v809, %v879
    %v883 = vxor.u32 %v882, 2147483648
    %v884 = vmul.f32 %v883, 1.442695
    %v885 = vpow.pop %v884
    %v886 = vadd.f32 %v885, 1.0
    %v887 = vrcp.pop %v886
    %v888 = vmul.f32 1.0, %v887
    %v889 = vtanh.pop %v882
    %v890 = vmul.f32 %v888, %v797
    %892 = vrot.lane.b32.xlu0 %v889, 32
    %v893 = vpop.permute.xlu0 %892
    %v895 = vmul.f32 %v888, %v893
    %897 = vrot.lane.b32.xlu0 %v895, 32
    %v898 = vpop.permute.xlu0 %897
    %v900 = vadd.f32 %v890, %v898
    %v901 = vtanh.pop %v900
    %903 = vrot.lane.b32.xlu0 %v901, 32
    %v904 = vpop.permute.xlu0 %903
    %v906 = vmul.f32 %v888, %v904
    %908 = vrot.lane.b32.xlu0 %v906, 64
    %v909 = vpop.permute.xlu0 %908
    %s911 = scalar_lea.vmem [#allocation11], 8
    %912 = vst.msk [vmem:[%s911] sm:$0xff] %vm701, %v909
    %v913 = vld [vmem:[%s311] sm:$0xff]
    %v914 = vsel %vm701, %v909, 0
    %916 = vmatprep.subr.mxu0 0.0
    %917 = vmatpush1.msra.mxu0 %v72
    %918 = vmatprep.subr.mxu0 0.0
    %919 = vmatpush1.msra.mxu0 %v73
    %920 = vmatprep.subr.mxu0 0.0
    %921 = vmatpush1.msra.mxu0 %v74
    %922 = vmatprep.subr.mxu0 0.0
    %923 = vmatpush1.msra.mxu0 %v75
    %924 = vmatprep.subr.mxu0 0.0
    %925 = vmatpush1.msra.mxu0 0.0
    %926 = vmatprep.subr.mxu0 0.0
    %927 = vmatpush1.msra.mxu0 0.0
    %928 = vmatprep.subr.mxu0 0.0
    %929 = vmatpush1.msra.mxu0 0.0
    %930 = vmatprep.subr.mxu0 0.0
    %931 = vmatpush1.msra.mxu0 0.0
    %932 = vmatprep.subr.mxu0 0.0
    %933 = vmatpush1.msra.mxu0 0.0
    %934 = vmatprep.subr.mxu0 0.0
    %935 = vmatpush1.msra.mxu0 0.0
    %936 = vmatprep.subr.mxu0 0.0
    %937 = vmatpush1.msra.mxu0 0.0
    %938 = vmatprep.subr.mxu0 0.0
    %939 = vmatpush1.msra.mxu0 0.0
    %940 = vmatprep.subr.mxu0 0.0
    %941 = vmatpush1.msra.mxu0 0.0
    %942 = vmatprep.subr.mxu0 0.0
    %943 = vmatpush1.msra.mxu0 0.0
    %944 = vmatprep.subr.mxu0 0.0
    %945 = vmatpush1.msra.mxu0 0.0
    %946 = vmatprep.subr.mxu0 0.0
    %947 = vmatpush1.msra.mxu0 0.0
    %948 = vmatprep.subr.mxu0 0.0
    %949 = vmatpush1.msra.mxu0 0.0
    %950 = vmatprep.subr.mxu0 0.0
    %951 = vmatpush1.msra.mxu0 0.0
    %952 = vmatprep.subr.mxu0 0.0
    %953 = vmatpush1.msra.mxu0 0.0
    %954 = vmatprep.subr.mxu0 0.0
    %955 = vmatpush1.msra.mxu0 0.0
    %956 = vmatprep.subr.mxu0 0.0
    %957 = vmatpush1.msra.mxu0 0.0
    %958 = vmatprep.subr.mxu0 0.0
    %959 = vmatpush1.msra.mxu0 0.0
    %960 = vmatprep.subr.mxu0 0.0
    %961 = vmatpush1.msra.mxu0 0.0
    %962 = vmatprep.subr.mxu0 0.0
    %963 = vmatpush1.msra.mxu0 0.0
    %964 = vmatprep.subr.mxu0 0.0
    %965 = vmatpush1.msra.mxu0 0.0
    %966 = vmatprep.subr.mxu0 0.0
    %967 = vmatpush1.msra.mxu0 0.0
    %968 = vmatprep.subr.mxu0 0.0
    %969 = vmatpush1.msra.mxu0 0.0
    %970 = vmatprep.subr.mxu0 0.0
    %971 = vmatpush1.msra.mxu0 0.0
    %972 = vmatprep.subr.mxu0 0.0
    %973 = vmatpush1.msra.mxu0 0.0
    %974 = vmatprep.subr.mxu0 0.0
    %975 = vmatpush1.msra.mxu0 0.0
    %976 = vmatprep.subr.mxu0 0.0
    %977 = vmatpush1.msra.mxu0 0.0
    %978 = vmatprep.subr.mxu0 0.0
    %979 = vmatpush1.msra.mxu0 0.0
    %980 = vmatprep.mubr.f32.mxu0 0.0
    %981 = vmatmul.mubr.f32.gmra.mrb[0].mxu0 %v914
    %v982 = vpop.f32.mrb[0].mxu0
    %v983 = vadd.f32 0.0, %v982
    %v984 = vpop.f32.mrb[0].mxu0
    %985 = vdwg.mxu0
    %v986 = vadd.f32 %v913, %v983
    %v987 = vxor.u32 %v986, 2147483648
    %v988 = vmul.f32 %v987, 1.442695
    %v989 = vpow.pop %v988
    %v990 = vadd.f32 %v989, 1.0
    %v991 = vrcp.pop %v990
    %v992 = vmul.f32 1.0, %v991
    %v993 = vtanh.pop %v986
    %v994 = vmul.f32 %v992, %v900
    %996 = vrot.lane.b32.xlu0 %v993, 32
    %v997 = vpop.permute.xlu0 %996
    %v999 = vmul.f32 %v992, %v997
    %1001 = vrot.lane.b32.xlu0 %v999, 32
    %v1002 = vpop.permute.xlu0 %1001
    %v1004 = vadd.f32 %v994, %v1002
    %v1005 = vtanh.pop %v1004
    %1007 = vrot.lane.b32.xlu0 %v1005, 32
    %v1008 = vpop.permute.xlu0 %1007
    %v1010 = vmul.f32 %v992, %v1008
    %1012 = vrot.lane.b32.xlu0 %v1010, 64
    %v1013 = vpop.permute.xlu0 %1012
    %s1015 = scalar_lea.vmem [#allocation11], 16
    %1016 = vst.msk [vmem:[%s1015] sm:$0xff] %vm701, %v1013
    %v1017 = vld [vmem:[%s388] sm:$0xff]
    %v1018 = vsel %vm701, %v1013, 0
    %1020 = vmatprep.subr.mxu0 0.0
    %1021 = vmatpush1.msra.mxu0 %v72
    %1022 = vmatprep.subr.mxu0 0.0
    %1023 = vmatpush1.msra.mxu0 %v73
    %1024 = vmatprep.subr.mxu0 0.0
    %1025 = vmatpush1.msra.mxu0 %v74
    %1026 = vmatprep.subr.mxu0 0.0
    %1027 = vmatpush1.msra.mxu0 %v75
    %1028 = vmatprep.subr.mxu0 0.0
    %1029 = vmatpush1.msra.mxu0 0.0
    %1030 = vmatprep.subr.mxu0 0.0
    %1031 = vmatpush1.msra.mxu0 0.0
    %1032 = vmatprep.subr.mxu0 0.0
    %1033 = vmatpush1.msra.mxu0 0.0
    %1034 = vmatprep.subr.mxu0 0.0
    %1035 = vmatpush1.msra.mxu0 0.0
    %1036 = vmatprep.subr.mxu0 0.0
    %1037 = vmatpush1.msra.mxu0 0.0
    %1038 = vmatprep.subr.mxu0 0.0
    %1039 = vmatpush1.msra.mxu0 0.0
    %1040 = vmatprep.subr.mxu0 0.0
    %1041 = vmatpush1.msra.mxu0 0.0
    %1042 = vmatprep.subr.mxu0 0.0
    %1043 = vmatpush1.msra.mxu0 0.0
    %1044 = vmatprep.subr.mxu0 0.0
    %1045 = vmatpush1.msra.mxu0 0.0
    %1046 = vmatprep.subr.mxu0 0.0
    %1047 = vmatpush1.msra.mxu0 0.0
    %1048 = vmatprep.subr.mxu0 0.0
    %1049 = vmatpush1.msra.mxu0 0.0
    %1050 = vmatprep.subr.mxu0 0.0
    %1051 = vmatpush1.msra.mxu0 0.0
    %1052 = vmatprep.subr.mxu0 0.0
    %1053 = vmatpush1.msra.mxu0 0.0
    %1054 = vmatprep.subr.mxu0 0.0
    %1055 = vmatpush1.msra.mxu0 0.0
    %1056 = vmatprep.subr.mxu0 0.0
    %1057 = vmatpush1.msra.mxu0 0.0
    %1058 = vmatprep.subr.mxu0 0.0
    %1059 = vmatpush1.msra.mxu0 0.0
    %1060 = vmatprep.subr.mxu0 0.0
    %1061 = vmatpush1.msra.mxu0 0.0
    %1062 = vmatprep.subr.mxu0 0.0
    %1063 = vmatpush1.msra.mxu0 0.0
    %1064 = vmatprep.subr.mxu0 0.0
    %1065 = vmatpush1.msra.mxu0 0.0
    %1066 = vmatprep.subr.mxu0 0.0
    %1067 = vmatpush1.msra.mxu0 0.0
    %1068 = vmatprep.subr.mxu0 0.0
    %1069 = vmatpush1.msra.mxu0 0.0
    %1070 = vmatprep.subr.mxu0 0.0
    %1071 = vmatpush1.msra.mxu0 0.0
    %1072 = vmatprep.subr.mxu0 0.0
    %1073 = vmatpush1.msra.mxu0 0.0
    %1074 = vmatprep.subr.mxu0 0.0
    %1075 = vmatpush1.msra.mxu0 0.0
    %1076 = vmatprep.subr.mxu0 0.0
    %1077 = vmatpush1.msra.mxu0 0.0
    %1078 = vmatprep.subr.mxu0 0.0
    %1079 = vmatpush1.msra.mxu0 0.0
    %1080 = vmatprep.subr.mxu0 0.0
    %1081 = vmatpush1.msra.mxu0 0.0
    %1082 = vmatprep.subr.mxu0 0.0
    %1083 = vmatpush1.msra.mxu0 0.0
    %1084 = vmatprep.mubr.f32.mxu0 0.0
    %1085 = vmatmul.mubr.f32.gmra.mrb[0].mxu0 %v1018
    %v1086 = vpop.f32.mrb[0].mxu0
    %v1087 = vadd.f32 0.0, %v1086
    %v1088 = vpop.f32.mrb[0].mxu0
    %1089 = vdwg.mxu0
    %v1090 = vadd.f32 %v1017, %v1087
    %v1091 = vxor.u32 %v1090, 2147483648
    %v1092 = vmul.f32 %v1091, 1.442695
    %v1093 = vpow.pop %v1092
    %v1094 = vadd.f32 %v1093, 1.0
    %v1095 = vrcp.pop %v1094
    %v1096 = vmul.f32 1.0, %v1095
    %v1097 = vtanh.pop %v1090
    %v1098 = vmul.f32 %v1096, %v1004
    %1100 = vrot.lane.b32.xlu0 %v1097, 32
    %v1101 = vpop.permute.xlu0 %1100
    %v1103 = vmul.f32 %v1096, %v1101
    %1105 = vrot.lane.b32.xlu0 %v1103, 32
    %v1106 = vpop.permute.xlu0 %1105
    %v1108 = vadd.f32 %v1098, %v1106
    %v1109 = vtanh.pop %v1108
    %1111 = vrot.lane.b32.xlu0 %v1109, 32
    %v1112 = vpop.permute.xlu0 %1111
    %v1114 = vmul.f32 %v1096, %v1112
    %1116 = vrot.lane.b32.xlu0 %v1114, 64
    %v1117 = vpop.permute.xlu0 %1116
    %s1119 = scalar_lea.vmem [#allocation11], 24
    %1120 = vst.msk [vmem:[%s1119] sm:$0xff] %vm701, %v1117
    %v1121 = vld [vmem:[%s465] sm:$0xff]
    %v1122 = vsel %vm701, %v1117, 0
    %1124 = vmatprep.subr.mxu0 0.0
    %1125 = vmatpush1.msra.mxu0 %v72
    %1126 = vmatprep.subr.mxu0 0.0
    %1127 = vmatpush1.msra.mxu0 %v73
    %1128 = vmatprep.subr.mxu0 0.0
    %1129 = vmatpush1.msra.mxu0 %v74
    %1130 = vmatprep.subr.mxu0 0.0
    %1131 = vmatpush1.msra.mxu0 %v75
    %1132 = vmatprep.subr.mxu0 0.0
    %1133 = vmatpush1.msra.mxu0 0.0
    %1134 = vmatprep.subr.mxu0 0.0
    %1135 = vmatpush1.msra.mxu0 0.0
    %1136 = vmatprep.subr.mxu0 0.0
    %1137 = vmatpush1.msra.mxu0 0.0
    %1138 = vmatprep.subr.mxu0 0.0
    %1139 = vmatpush1.msra.mxu0 0.0
    %1140 = vmatprep.subr.mxu0 0.0
    %1141 = vmatpush1.msra.mxu0 0.0
    %1142 = vmatprep.subr.mxu0 0.0
    %1143 = vmatpush1.msra.mxu0 0.0
    %1144 = vmatprep.subr.mxu0 0.0
    %1145 = vmatpush1.msra.mxu0 0.0
    %1146 = vmatprep.subr.mxu0 0.0
    %1147 = vmatpush1.msra.mxu0 0.0
    %1148 = vmatprep.subr.mxu0 0.0
    %1149 = vmatpush1.msra.mxu0 0.0
    %1150 = vmatprep.subr.mxu0 0.0
    %1151 = vmatpush1.msra.mxu0 0.0
    %1152 = vmatprep.subr.mxu0 0.0
    %1153 = vmatpush1.msra.mxu0 0.0
    %1154 = vmatprep.subr.mxu0 0.0
    %1155 = vmatpush1.msra.mxu0 0.0
    %1156 = vmatprep.subr.mxu0 0.0
    %1157 = vmatpush1.msra.mxu0 0.0
    %1158 = vmatprep.subr.mxu0 0.0
    %1159 = vmatpush1.msra.mxu0 0.0
    %1160 = vmatprep.subr.mxu0 0.0
    %1161 = vmatpush1.msra.mxu0 0.0
    %1162 = vmatprep.subr.mxu0 0.0
    %1163 = vmatpush1.msra.mxu0 0.0
    %1164 = vmatprep.subr.mxu0 0.0
    %1165 = vmatpush1.msra.mxu0 0.0
    %1166 = vmatprep.subr.mxu0 0.0
    %1167 = vmatpush1.msra.mxu0 0.0
    %1168 = vmatprep.subr.mxu0 0.0
    %1169 = vmatpush1.msra.mxu0 0.0
    %1170 = vmatprep.subr.mxu0 0.0
    %1171 = vmatpush1.msra.mxu0 0.0
    %1172 = vmatprep.subr.mxu0 0.0
    %1173 = vmatpush1.msra.mxu0 0.0
    %1174 = vmatprep.subr.mxu0 0.0
    %1175 = vmatpush1.msra.mxu0 0.0
    %1176 = vmatprep.subr.mxu0 0.0
    %1177 = vmatpush1.msra.mxu0 0.0
    %1178 = vmatprep.subr.mxu0 0.0
    %1179 = vmatpush1.msra.mxu0 0.0
    %1180 = vmatprep.subr.mxu0 0.0
    %1181 = vmatpush1.msra.mxu0 0.0
    %1182 = vmatprep.subr.mxu0 0.0
    %1183 = vmatpush1.msra.mxu0 0.0
    %1184 = vmatprep.subr.mxu0 0.0
    %1185 = vmatpush1.msra.mxu0 0.0
    %1186 = vmatprep.subr.mxu0 0.0
    %1187 = vmatpush1.msra.mxu0 0.0
    %1188 = vmatprep.mubr.f32.mxu0 0.0
    %1189 = vmatmul.mubr.f32.gmra.mrb[0].mxu0 %v1122
    %v1190 = vpop.f32.mrb[0].mxu0
    %v1191 = vadd.f32 0.0, %v1190
    %v1192 = vpop.f32.mrb[0].mxu0
    %1193 = vdwg.mxu0
    %v1194 = vadd.f32 %v1121, %v1191
    %v1195 = vxor.u32 %v1194, 2147483648
    %v1196 = vmul.f32 %v1195, 1.442695
    %v1197 = vpow.pop %v1196
    %v1198 = vadd.f32 %v1197, 1.0
    %v1199 = vrcp.pop %v1198
    %v1200 = vmul.f32 1.0, %v1199
    %v1201 = vtanh.pop %v1194
    %v1202 = vmul.f32 %v1200, %v1108
    %1204 = vrot.lane.b32.xlu0 %v1201, 32
    %v1205 = vpop.permute.xlu0 %1204
    %v1207 = vmul.f32 %v1200, %v1205
    %1209 = vrot.lane.b32.xlu0 %v1207, 32
    %v1210 = vpop.permute.xlu0 %1209
    %v1212 = vadd.f32 %v1202, %v1210
    %v1213 = vtanh.pop %v1212
    %1215 = vrot.lane.b32.xlu0 %v1213, 32
    %v1216 = vpop.permute.xlu0 %1215
    %v1218 = vmul.f32 %v1200, %v1216
    %1220 = vrot.lane.b32.xlu0 %v1218, 64
    %v1221 = vpop.permute.xlu0 %1220
    %s1223 = scalar_lea.vmem [#allocation11], 32
    %1224 = vst.msk [vmem:[%s1223] sm:$0xff] %vm701, %v1221
    %v1225 = vld [vmem:[%s542] sm:$0xff]
    %v1226 = vsel %vm701, %v1221, 0
    %1228 = vmatprep.subr.mxu0 0.0
    %1229 = vmatpush1.msra.mxu0 %v72
    %1230 = vmatprep.subr.mxu0 0.0
    %1231 = vmatpush1.msra.mxu0 %v73
    %1232 = vmatprep.subr.mxu0 0.0
    %1233 = vmatpush1.msra.mxu0 %v74
    %1234 = vmatprep.subr.mxu0 0.0
    %1235 = vmatpush1.msra.mxu0 %v75
    %1236 = vmatprep.subr.mxu0 0.0
    %1237 = vmatpush1.msra.mxu0 0.0
    %1238 = vmatprep.subr.mxu0 0.0
    %1239 = vmatpush1.msra.mxu0 0.0
    %1240 = vmatprep.subr.mxu0 0.0
    %1241 = vmatpush1.msra.mxu0 0.0
    %1242 = vmatprep.subr.mxu0 0.0
    %1243 = vmatpush1.msra.mxu0 0.0
    %1244 = vmatprep.subr.mxu0 0.0
    %1245 = vmatpush1.msra.mxu0 0.0
    %1246 = vmatprep.subr.mxu0 0.0
    %1247 = vmatpush1.msra.mxu0 0.0
    %1248 = vmatprep.subr.mxu0 0.0
    %1249 = vmatpush1.msra.mxu0 0.0
    %1250 = vmatprep.subr.mxu0 0.0
    %1251 = vmatpush1.msra.mxu0 0.0
    %1252 = vmatprep.subr.mxu0 0.0
    %1253 = vmatpush1.msra.mxu0 0.0
    %1254 = vmatprep.subr.mxu0 0.0
    %1255 = vmatpush1.msra.mxu0 0.0
    %1256 = vmatprep.subr.mxu0 0.0
    %1257 = vmatpush1.msra.mxu0 0.0
    %1258 = vmatprep.subr.mxu0 0.0
    %1259 = vmatpush1.msra.mxu0 0.0
    %1260 = vmatprep.subr.mxu0 0.0
    %1261 = vmatpush1.msra.mxu0 0.0
    %1262 = vmatprep.subr.mxu0 0.0
    %1263 = vmatpush1.msra.mxu0 0.0
    %1264 = vmatprep.subr.mxu0 0.0
    %1265 = vmatpush1.msra.mxu0 0.0
    %1266 = vmatprep.subr.mxu0 0.0
    %1267 = vmatpush1.msra.mxu0 0.0
    %1268 = vmatprep.subr.mxu0 0.0
    %1269 = vmatpush1.msra.mxu0 0.0
    %1270 = vmatprep.subr.mxu0 0.0
    %1271 = vmatpush1.msra.mxu0 0.0
    %1272 = vmatprep.subr.mxu0 0.0
    %1273 = vmatpush1.msra.mxu0 0.0
    %1274 = vmatprep.subr.mxu0 0.0
    %1275 = vmatpush1.msra.mxu0 0.0
    %1276 = vmatprep.subr.mxu0 0.0
    %1277 = vmatpush1.msra.mxu0 0.0
    %1278 = vmatprep.subr.mxu0 0.0
    %1279 = vmatpush1.msra.mxu0 0.0
    %1280 = vmatprep.subr.mxu0 0.0
    %1281 = vmatpush1.msra.mxu0 0.0
    %1282 = vmatprep.subr.mxu0 0.0
    %1283 = vmatpush1.msra.mxu0 0.0
    %1284 = vmatprep.subr.mxu0 0.0
    %1285 = vmatpush1.msra.mxu0 0.0
    %1286 = vmatprep.subr.mxu0 0.0
    %1287 = vmatpush1.msra.mxu0 0.0
    %1288 = vmatprep.subr.mxu0 0.0
    %1289 = vmatpush1.msra.mxu0 0.0
    %1290 = vmatprep.subr.mxu0 0.0
    %1291 = vmatpush1.msra.mxu0 0.0
    %1292 = vmatprep.mubr.f32.mxu0 0.0
    %1293 = vmatmul.mubr.f32.gmra.mrb[0].mxu0 %v1226
    %v1294 = vpop.f32.mrb[0].mxu0
    %v1295 = vadd.f32 0.0, %v1294
    %v1296 = vpop.f32.mrb[0].mxu0
    %1297 = vdwg.mxu0
    %v1298 = vadd.f32 %v1225, %v1295
    %v1299 = vxor.u32 %v1298, 2147483648
    %v1300 = vmul.f32 %v1299, 1.442695
    %v1301 = vpow.pop %v1300
    %v1302 = vadd.f32 %v1301, 1.0
    %v1303 = vrcp.pop %v1302
    %v1304 = vmul.f32 1.0, %v1303
    %v1305 = vtanh.pop %v1298
    %v1306 = vmul.f32 %v1304, %v1212
    %1308 = vrot.lane.b32.xlu0 %v1305, 32
    %v1309 = vpop.permute.xlu0 %1308
    %v1311 = vmul.f32 %v1304, %v1309
    %1313 = vrot.lane.b32.xlu0 %v1311, 32
    %v1314 = vpop.permute.xlu0 %1313
    %v1316 = vadd.f32 %v1306, %v1314
    %v1317 = vtanh.pop %v1316
    %1319 = vrot.lane.b32.xlu0 %v1317, 32
    %v1320 = vpop.permute.xlu0 %1319
    %v1322 = vmul.f32 %v1304, %v1320
    %1324 = vrot.lane.b32.xlu0 %v1322, 64
    %v1325 = vpop.permute.xlu0 %1324
    %s1327 = scalar_lea.vmem [#allocation11], 40
    %1328 = vst.msk [vmem:[%s1327] sm:$0xff] %vm701, %v1325
    %v1329 = vld [vmem:[%s619] sm:$0xff]
    %v1330 = vsel %vm701, %v1325, 0
    %1332 = vmatprep.subr.mxu0 0.0
    %1333 = vmatpush1.msra.mxu0 %v72
    %1334 = vmatprep.subr.mxu0 0.0
    %1335 = vmatpush1.msra.mxu0 %v73
    %1336 = vmatprep.subr.mxu0 0.0
    %1337 = vmatpush1.msra.mxu0 %v74
    %1338 = vmatprep.subr.mxu0 0.0
    %1339 = vmatpush1.msra.mxu0 %v75
    %1340 = vmatprep.subr.mxu0 0.0
    %1341 = vmatpush1.msra.mxu0 0.0
    %1342 = vmatprep.subr.mxu0 0.0
    %1343 = vmatpush1.msra.mxu0 0.0
    %1344 = vmatprep.subr.mxu0 0.0
    %1345 = vmatpush1.msra.mxu0 0.0
    %1346 = vmatprep.subr.mxu0 0.0
    %1347 = vmatpush1.msra.mxu0 0.0
    %1348 = vmatprep.subr.mxu0 0.0
    %1349 = vmatpush1.msra.mxu0 0.0
    %1350 = vmatprep.subr.mxu0 0.0
    %1351 = vmatpush1.msra.mxu0 0.0
    %1352 = vmatprep.subr.mxu0 0.0
    %1353 = vmatpush1.msra.mxu0 0.0
    %1354 = vmatprep.subr.mxu0 0.0
    %1355 = vmatpush1.msra.mxu0 0.0
    %1356 = vmatprep.subr.mxu0 0.0
    %1357 = vmatpush1.msra.mxu0 0.0
    %1358 = vmatprep.subr.mxu0 0.0
    %1359 = vmatpush1.msra.mxu0 0.0
    %1360 = vmatprep.subr.mxu0 0.0
    %1361 = vmatpush1.msra.mxu0 0.0
    %1362 = vmatprep.subr.mxu0 0.0
    %1363 = vmatpush1.msra.mxu0 0.0
    %1364 = vmatprep.subr.mxu0 0.0
    %1365 = vmatpush1.msra.mxu0 0.0
    %1366 = vmatprep.subr.mxu0 0.0
    %1367 = vmatpush1.msra.mxu0 0.0
    %1368 = vmatprep.subr.mxu0 0.0
    %1369 = vmatpush1.msra.mxu0 0.0
    %1370 = vmatprep.subr.mxu0 0.0
    %1371 = vmatpush1.msra.mxu0 0.0
    %1372 = vmatprep.subr.mxu0 0.0
    %1373 = vmatpush1.msra.mxu0 0.0
    %1374 = vmatprep.subr.mxu0 0.0
    %1375 = vmatpush1.msra.mxu0 0.0
    %1376 = vmatprep.subr.mxu0 0.0
    %1377 = vmatpush1.msra.mxu0 0.0
    %1378 = vmatprep.subr.mxu0 0.0
    %1379 = vmatpush1.msra.mxu0 0.0
    %1380 = vmatprep.subr.mxu0 0.0
    %1381 = vmatpush1.msra.mxu0 0.0
    %1382 = vmatprep.subr.mxu0 0.0
    %1383 = vmatpush1.msra.mxu0 0.0
    %1384 = vmatprep.subr.mxu0 0.0
    %1385 = vmatpush1.msra.mxu0 0.0
    %1386 = vmatprep.subr.mxu0 0.0
    %1387 = vmatpush1.msra.mxu0 0.0
    %1388 = vmatprep.subr.mxu0 0.0
    %1389 = vmatpush1.msra.mxu0 0.0
    %1390 = vmatprep.subr.mxu0 0.0
    %1391 = vmatpush1.msra.mxu0 0.0
    %1392 = vmatprep.subr.mxu0 0.0
    %1393 = vmatpush1.msra.mxu0 0.0
    %1394 = vmatprep.subr.mxu0 0.0
    %1395 = vmatpush1.msra.mxu0 0.0
    %1396 = vmatprep.mubr.f32.mxu0 0.0
    %1397 = vmatmul.mubr.f32.gmra.mrb[0].mxu0 %v1330
    %v1398 = vpop.f32.mrb[0].mxu0
    %v1399 = vadd.f32 0.0, %v1398
    %v1400 = vpop.f32.mrb[0].mxu0
    %1401 = vdwg.mxu0
    %v1402 = vadd.f32 %v1329, %v1399
    %v1403 = vxor.u32 %v1402, 2147483648
    %v1404 = vmul.f32 %v1403, 1.442695
    %v1405 = vpow.pop %v1404
    %v1406 = vadd.f32 %v1405, 1.0
    %v1407 = vrcp.pop %v1406
    %v1408 = vmul.f32 1.0, %v1407
    %v1409 = vtanh.pop %v1402
    %v1410 = vmul.f32 %v1408, %v1316
    %1412 = vrot.lane.b32.xlu0 %v1409, 32
    %v1413 = vpop.permute.xlu0 %1412
    %v1415 = vmul.f32 %v1408, %v1413
    %1417 = vrot.lane.b32.xlu0 %v1415, 32
    %v1418 = vpop.permute.xlu0 %1417
    %v1420 = vadd.f32 %v1410, %v1418
    %v1421 = vtanh.pop %v1420
    %1423 = vrot.lane.b32.xlu0 %v1421, 32
    %v1424 = vpop.permute.xlu0 %1423
    %v1426 = vmul.f32 %v1408, %v1424
    %1428 = vrot.lane.b32.xlu0 %v1426, 64
    %v1429 = vpop.permute.xlu0 %1428
    %s1431 = scalar_lea.vmem [#allocation11], 48
    %1432 = vst.msk [vmem:[%s1431] sm:$0xff] %vm701, %v1429
    %v1433 = vld [vmem:[%s696] sm:$0xff]
    %v1434 = vsel %vm701, %v1429, 0
    %1436 = vmatprep.subr.mxu0 0.0
    %1437 = vmatpush1.msra.mxu0 %v72
    %1438 = vmatprep.subr.mxu0 0.0
    %1439 = vmatpush1.msra.mxu0 %v73
    %1440 = vmatprep.subr.mxu0 0.0
    %1441 = vmatpush1.msra.mxu0 %v74
    %1442 = vmatprep.subr.mxu0 0.0
    %1443 = vmatpush1.msra.mxu0 %v75
    %1444 = vmatprep.subr.mxu0 0.0
    %1445 = vmatpush1.msra.mxu0 0.0
    %1446 = vmatprep.subr.mxu0 0.0
    %1447 = vmatpush1.msra.mxu0 0.0
    %1448 = vmatprep.subr.mxu0 0.0
    %1449 = vmatpush1.msra.mxu0 0.0
    %1450 = vmatprep.subr.mxu0 0.0
    %1451 = vmatpush1.msra.mxu0 0.0
    %1452 = vmatprep.subr.mxu0 0.0
    %1453 = vmatpush1.msra.mxu0 0.0
    %1454 = vmatprep.subr.mxu0 0.0
    %1455 = vmatpush1.msra.mxu0 0.0
    %1456 = vmatprep.subr.mxu0 0.0
    %1457 = vmatpush1.msra.mxu0 0.0
    %1458 = vmatprep.subr.mxu0 0.0
    %1459 = vmatpush1.msra.mxu0 0.0
    %1460 = vmatprep.subr.mxu0 0.0
    %1461 = vmatpush1.msra.mxu0 0.0
    %1462 = vmatprep.subr.mxu0 0.0
    %1463 = vmatpush1.msra.mxu0 0.0
    %1464 = vmatprep.subr.mxu0 0.0
    %1465 = vmatpush1.msra.mxu0 0.0
    %1466 = vmatprep.subr.mxu0 0.0
    %1467 = vmatpush1.msra.mxu0 0.0
    %1468 = vmatprep.subr.mxu0 0.0
    %1469 = vmatpush1.msra.mxu0 0.0
    %1470 = vmatprep.subr.mxu0 0.0
    %1471 = vmatpush1.msra.mxu0 0.0
    %1472 = vmatprep.subr.mxu0 0.0
    %1473 = vmatpush1.msra.mxu0 0.0
    %1474 = vmatprep.subr.mxu0 0.0
    %1475 = vmatpush1.msra.mxu0 0.0
    %1476 = vmatprep.subr.mxu0 0.0
    %1477 = vmatpush1.msra.mxu0 0.0
    %1478 = vmatprep.subr.mxu0 0.0
    %1479 = vmatpush1.msra.mxu0 0.0
    %1480 = vmatprep.subr.mxu0 0.0
    %1481 = vmatpush1.msra.mxu0 0.0
    %1482 = vmatprep.subr.mxu0 0.0
    %1483 = vmatpush1.msra.mxu0 0.0
    %1484 = vmatprep.subr.mxu0 0.0
    %1485 = vmatpush1.msra.mxu0 0.0
    %1486 = vmatprep.subr.mxu0 0.0
    %1487 = vmatpush1.msra.mxu0 0.0
    %1488 = vmatprep.subr.mxu0 0.0
    %1489 = vmatpush1.msra.mxu0 0.0
    %1490 = vmatprep.subr.mxu0 0.0
    %1491 = vmatpush1.msra.mxu0 0.0
    %1492 = vmatprep.subr.mxu0 0.0
    %1493 = vmatpush1.msra.mxu0 0.0
    %1494 = vmatprep.subr.mxu0 0.0
    %1495 = vmatpush1.msra.mxu0 0.0
    %1496 = vmatprep.subr.mxu0 0.0
    %1497 = vmatpush1.msra.mxu0 0.0
    %1498 = vmatprep.subr.mxu0 0.0
    %1499 = vmatpush1.msra.mxu0 0.0
    %1500 = vmatprep.mubr.f32.mxu0 0.0
    %1501 = vmatmul.mubr.f32.gmra.mrb[0].mxu0 %v1434
    %v1502 = vpop.f32.mrb[0].mxu0
    %v1503 = vadd.f32 0.0, %v1502
    %v1504 = vpop.f32.mrb[0].mxu0
    %1505 = vdwg.mxu0
    %v1506 = vadd.f32 %v1433, %v1503
    %v1507 = vxor.u32 %v1506, 2147483648
    %v1508 = vmul.f32 %v1507, 1.442695
    %v1509 = vpow.pop %v1508
    %v1510 = vadd.f32 %v1509, 1.0
    %v1511 = vrcp.pop %v1510
    %v1512 = vmul.f32 1.0, %v1511
    %v1513 = vtanh.pop %v1506
    %v1514 = vmul.f32 %v1512, %v1420
    %1516 = vrot.lane.b32.xlu0 %v1513, 32
    %v1517 = vpop.permute.xlu0 %1516
    %v1519 = vmul.f32 %v1512, %v1517
    %1521 = vrot.lane.b32.xlu0 %v1519, 32
    %v1522 = vpop.permute.xlu0 %1521
    %v1524 = vadd.f32 %v1514, %v1522
    %v1525 = vtanh.pop %v1524
    %1527 = vrot.lane.b32.xlu0 %v1525, 32
    %v1528 = vpop.permute.xlu0 %1527
    %v1530 = vmul.f32 %v1512, %v1528
    %1532 = vrot.lane.b32.xlu0 %v1530, 64
    %v1533 = vpop.permute.xlu0 %1532
    %s1535 = scalar_lea.vmem [#allocation11], 56
    %1536 = vst.msk [vmem:[%s1535] sm:$0xff] %vm701, %v1533
    %1537 = vst.msk [vmem:[#allocation3] sm:$0xff] %vm701, %v1533
    %1539 = vrot.lane.b32.xlu0 %v1524, 96
    %v1540 = vpop.permute.xlu0 %1539
    %1542 = vst.msk [vmem:[#allocation4] sm:$0xff] %vm701, %v1540
    // Predicated region
    $region34: #{tpu_custom_call.1} parent=1 // pred_check
      %p1543 = pneg %p63
    $region35: #{tpu_custom_call.1} parent=1 // pred_check_branch
      %1545 = sbr.rel (%p1543) target = $region37
    $region36: #{tpu_custom_call.1} parent=1 // pred_region
      %1546 = vst.msk [vmem:[#allocation12] sm:$0xff] %vm701, %v1533
      %1547 = vst.msk [vmem:[#allocation14] sm:$0xff] %vm701, %v1540
    $region37: #{tpu_custom_call.1} parent=1 // pred_fallthru
      _
    // Predicated region
    $region38: #{tpu_custom_call.1} parent=1 // pred_check
      _
    $region39: #{tpu_custom_call.1} parent=1 // pred_check_branch
      %1549 = sbr.rel (0) target = $region41
    $region40: #{tpu_custom_call.1} parent=1 // pred_region
      %s1551 = ssub.s32 1024, 1024
      %1552 = vsyncadd [#allocation7], %s1551
      %s1553 = sshll.u32 [#allocation11], 4
      %s1554 = int_to_ptr.vmem [resolvable:$true] %s1553
      %1559 = dma.vmem_to_hbm [thread:$0]  %s1554, 1024, %s4, [#allocation7], 128, 128, 8
    $region41: #{tpu_custom_call.1} parent=1 // pred_fallthru
      _
    // Predicated region
    $region42: #{tpu_custom_call.1} parent=1 // pred_check
      _
    $region43: #{tpu_custom_call.1} parent=1 // pred_check_branch
      %1561 = sbr.rel (0) target = $region45
    $region44: #{tpu_custom_call.1} parent=1 // pred_region
      %s1563 = ssub.s32 128, 128
      %1564 = vsyncadd [#allocation13], %s1563
      %s1566 = sshll.u32 [#allocation12], 4
      %s1567 = int_to_ptr.vmem [resolvable:$true] %s1566
      %1569 = dma.vmem_to_hbm [thread:$0]  %s1567, 128, %s5, [#allocation13]
    $region45: #{tpu_custom_call.1} parent=1 // pred_fallthru
      _
    // Predicated region
    $region46: #{tpu_custom_call.1} parent=1 // pred_check
      _
    $region47: #{tpu_custom_call.1} parent=1 // pred_check_branch
      %1571 = sbr.rel (0) target = $region49
    $region48: #{tpu_custom_call.1} parent=1 // pred_region
      %s1573 = ssub.s32 128, 128
      %1574 = vsyncadd [#allocation13], %s1573
      %s1576 = sshll.u32 [#allocation14], 4
      %s1577 = int_to_ptr.vmem [resolvable:$true] %s1576
      %1579 = dma.vmem_to_hbm [thread:$0]  %s1577, 128, %s6, [#allocation13]
    $region49: #{tpu_custom_call.1} parent=1 // pred_fallthru
      _
    // Predicated region
    $region50: #{tpu_custom_call.1} parent=1 // pred_check
      _
    $region51: #{tpu_custom_call.1} parent=1 // pred_check_branch
      %1581 = sbr.rel (0) target = $region53
    $region52: #{tpu_custom_call.1} parent=1 // pred_region
      %1582 = dma.done [#allocation7], 1024
    $region53: #{tpu_custom_call.1} parent=1 // pred_fallthru
      _
    // Predicated region
    $region54: #{tpu_custom_call.1} parent=1 // pred_check
      _
    $region55: #{tpu_custom_call.1} parent=1 // pred_check_branch
      %1584 = sbr.rel (0) target = $region57
    $region56: #{tpu_custom_call.1} parent=1 // pred_region
      %1585 = dma.done [#allocation13], 128
    $region57: #{tpu_custom_call.1} parent=1 // pred_fallthru
      _
    // Predicated region
    $region58: #{tpu_custom_call.1} parent=1 // pred_check
      _
    $region59: #{tpu_custom_call.1} parent=1 // pred_check_branch
      %1587 = sbr.rel (0) target = $region61
    $region60: #{tpu_custom_call.1} parent=1 // pred_region
      %1588 = dma.done [#allocation13], 128
    $region61: #{tpu_custom_call.1} parent=1 // pred_fallthru
      _
    %1589 = vsyncpa [#allocation6], 1
    %1590 = vsyncpa [#allocation9], 1
    %1591 = vsyncpa [#allocation7], 1
    %1592 = vsyncpa [#allocation13], 1

</llo_original>
